<compile_context>
chip_gen: v6e
topology: v6e:2x2x1
jax: 0.10.0
libtpu: 0.0.40
codegen_flags: <defaults>
</compile_context>

<pallas_src>
import functools

import jax
import jax.numpy as jnp
from jax.experimental import pallas as pl

F32 = jnp.float32
BF16 = jnp.bfloat16

# ---------------- model hyper-parameters (small synthetic config) -----------
B = 2              # batch
T_TXT = 8          # text length
T_MEL = 16         # mel frames
NMEL = 16          # n_channels (mel bins / att channels)
HID = 32           # text-encoder hidden dim
SPK_DIM = 16       # speaker embedding dim
N_VOCAB = 40       # n_symbols
N_SPEAKERS = 4
KSZ = 3            # conv kernel size
DEC_HID = 32       # CFM estimator hidden dim
TEMPERATURE = 0.0005   # aligner temperature
SIGMA_MIN = 1e-4       # CFM sigma_min
BINARIZATION_START_STEPS = 1000

PACK_W = 128                                  # lane-dense packed output width
_MEL_PACK = 3 * NMEL + 3 * T_TXT              # dec | u | mu_y | soft | logp | hard
assert _MEL_PACK <= PACK_W and 2 * T_TXT <= PACK_W


# ---------------- in-kernel helper: K=3 "same" conv, per-tap matmuls ---------
def _conv3_same(x, w_ref, b_ref):
    """K=3 'same' 1-D conv over time as 3 per-tap accumulating MXU matmuls.

    x:     (B, T, Cin) f32 value (channels-last).
    w_ref: (3*Cin, Cout) bf16 weight ref, row-blocks ordered [tap t-1; t; t+1].
    b_ref: (1, Cout) f32 bias ref.
    No im2col scratch / padded slab: each tap is a sublane-shifted view of x
    (zero row at the sequence edge); accumulation stays in f32.
    """
    bsz, t, cin = x.shape
    zrow = jnp.zeros((bsz, 1, cin), F32)
    taps = (jnp.concatenate([zrow, x[:, :t - 1, :]], axis=1),   # x[tau-1]
            x,                                                  # x[tau]
            jnp.concatenate([x[:, 1:, :], zrow], axis=1))       # x[tau+1]
    y = b_ref[...]
    for k, xk in enumerate(taps):
        y = y + jnp.dot(xk.reshape(bsz * t, cin).astype(BF16),
                        w_ref[k * cin:(k + 1) * cin, :],
                        preferred_element_type=F32)
    return y.reshape(bsz, t, -1)


# ---------------- single fused MatchaTTS forward kernel ----------------------
def _matcha_kernel(
        # data
        enc_in_ref, tvmask2_ref, tvmask3_ref, tpad3_ref, feats_ref, z_ref,
        t_ref, sid_ref, fmask_ref,
        # text encoder MLP
        enc_w1_ref, enc_b1_ref, enc_wmu_ref, enc_bmu_ref,
        # duration predictor
        dp_w1_ref, dp_b1_ref, dp_w2_ref, dp_b2_ref, dp_wout_ref, dp_bout_ref,
        # alignment encoder
        al_qw_ref, al_qb_ref, al_kw_ref, al_kb_ref, al_sqkw_ref, al_sqkb_ref,
        # CFM decoder
        cond_wt_ref, cond_ws_ref, cond_b_ref,
        dec_w1_ref, dec_b1_ref, dec_w2_ref, dec_b2_ref,
        # packed outputs
        out_mel_ref, out_txt_ref):
    bsz, tmel, cmel = feats_ref.shape
    ttxt = tvmask3_ref.shape[1]

    # ---- text encoder MLP ----
    tvm2 = tvmask2_ref[...]                               # (B*T_txt, 1) valid
    h = jnp.dot(enc_in_ref[...].astype(BF16), enc_w1_ref[...],
                preferred_element_type=F32) + enc_b1_ref[...]
    h = jnp.maximum(h, 0.0) * tvm2                        # txt_emb rows
    hb = h.astype(BF16)                                   # cast once, reused twice
    mu_x2 = (jnp.dot(hb, enc_wmu_ref[...], preferred_element_type=F32)
             + enc_bmu_ref[...]) * tvm2
    mu_x = mu_x2.reshape(bsz, ttxt, cmel)

    # ---- duration predictor: conv->relu->conv->relu->head ----
    mdur = tvmask3_ref[...]                               # (B, T_txt, 1) valid
    hd = mu_x * mdur                                      # mask-before-conv
    hd = jnp.maximum(_conv3_same(hd, dp_w1_ref, dp_b1_ref), 0.0) * mdur
    hd = jnp.maximum(_conv3_same(hd, dp_w2_ref, dp_b2_ref), 0.0) * mdur
    # linear head fused as a lane reduction (no standalone (M,1) matmul)
    logd = (jnp.sum(hd * dp_wout_ref[...], axis=-1)
            + dp_bout_ref[...]) * mdur[..., 0]            # (B, T_txt)

    # ---- aligner: q/k proj + speaker bias + L2-distance softmax (batched) ----
    sid_bf = sid_ref[...].astype(BF16)
    sqk = (jnp.dot(sid_bf, al_sqkw_ref[...], preferred_element_type=F32)
           + al_sqkb_ref[...])                            # fused [sq | sk]
    sq = sqk[:, 0:cmel][:, None, :]                       # (B, 1, C)
    sk = sqk[:, cmel:2 * cmel][:, None, :]
    q = (jnp.dot(feats_ref[...].reshape(bsz * tmel, cmel).astype(BF16),
                 al_qw_ref[...], preferred_element_type=F32)
         + al_qb_ref[...]).reshape(bsz, tmel, cmel) + sq  # (B, T_mel, C)
    k = (jnp.dot(hb, al_kw_ref[...], preferred_element_type=F32)
         + al_kb_ref[...]).reshape(bsz, ttxt, cmel) + sk  # (B, T_txt, C)
    qq = jnp.sum(q * q, axis=-1, keepdims=True)           # (B, T_mel, 1)
    kk = jnp.sum(k * k, axis=-1)[:, None, :]              # (B, 1, T_txt)
    qk = jnp.einsum('bmd,bnd->bmn', q, k, preferred_element_type=F32)
    dist2 = qq + kk - 2.0 * qk
    scores = -TEMPERATURE * dist2 - 1e9 * tpad3_ref[...]  # pad bias (B,1,T_txt)
    mx = jnp.max(scores, axis=-1, keepdims=True)
    e = jnp.exp(scores - mx)
    s = jnp.sum(e, axis=-1, keepdims=True)
    soft = e * pl.reciprocal(s, approx=True)              # EUP, frees VPU slots
    logp = scores - (mx + jnp.log(s))

    # ---- binarization folded in: per-frame argmax + hard durations ----
    # TODO(synk): true Monotonic Alignment Search (b_mas, CPU dynamic program)
    #             has no clean Pallas equivalent; per-frame argmax is used.
    fvm = fmask_ref[...]                                  # (B, T_mel, 1) valid
    iota_n = jax.lax.broadcasted_iota(jnp.int32, scores.shape, 2)
    neg_idx = jnp.where(scores >= mx, -iota_n, -ttxt)     # first-max tie-break
    first_idx = -jnp.max(neg_idx, axis=-1, keepdims=True)
    hard = (iota_n == first_idx).astype(F32) * fvm        # (B, T_mel, T_txt)
    hard_dur = jnp.sum(hard, axis=1)                      # (B, T_txt)

    # ---- soft-attention expansion: mu_y = attn_soft @ mu_x ----
    muy = jnp.einsum('bmn,bnd->bmd', soft.astype(BF16), mu_x.astype(BF16),
                     preferred_element_type=F32)          # (B, T_mel, C)

    # ---- CFM decoder: flow-matching mix + conditioning + conv estimator ----
    # TODO(synk): the real CFM estimator is a U-Net/transformer; replaced by a
    #             fused 2-layer conv estimator with time/speaker conditioning.
    csm = 1.0 - SIGMA_MIN
    x1 = feats_ref[...]
    z = z_ref[...]
    u = (x1 - csm * z) * fvm
    tb = jnp.broadcast_to(t_ref[...], (bsz, tmel, 1))     # per-batch scalar t
    y = (1.0 - csm * tb) * z + tb * x1                    # (B, T_mel, C)
    sidc = (jnp.dot(sid_bf, cond_ws_ref[...], preferred_element_type=F32)
            + cond_b_ref[...])                            # (B, 2C)
    cond3 = t_ref[...] * cond_wt_ref[...][None] + sidc[:, None, :]  # (B,1,2C)
    hcat = jnp.concatenate([y, muy], axis=-1) + cond3     # (B, T_mel, 2C)
    h1 = jnp.tanh(_conv3_same(hcat, dec_w1_ref, dec_b1_ref))
    dec = _conv3_same(h1, dec_w2_ref, dec_b2_ref) * fvm

    # ---- lane-dense packed outputs (sliced back in the JAX wrapper) ----
    o = 3 * cmel
    out_mel_ref[:, :, 0:cmel] = dec
    out_mel_ref[:, :, cmel:2 * cmel] = u
    out_mel_ref[:, :, 2 * cmel:o] = muy
    out_mel_ref[:, :, o:o + ttxt] = soft
    out_mel_ref[:, :, o + ttxt:o + 2 * ttxt] = logp
    out_mel_ref[:, :, o + 2 * ttxt:o + 3 * ttxt] = hard
    out_mel_ref[:, :, o + 3 * ttxt:] = jnp.zeros(
        (bsz, tmel, PACK_W - o - 3 * ttxt), F32)

    out_txt_ref[:, 0:ttxt] = logd
    out_txt_ref[:, ttxt:2 * ttxt] = hard_dur
    out_txt_ref[:, 2 * ttxt:] = jnp.zeros((bsz, PACK_W - 2 * ttxt), F32)


def matcha_fused(params, enc_in, tvmask2, tvmask3, tpad3, feats_t, z, t3,
                 sid_embs, fmask3):
    bsz, tmel, _ = feats_t.shape
    return pl.pallas_call(
        _matcha_kernel,
        out_shape=(jax.ShapeDtypeStruct((bsz, tmel, PACK_W), F32),
                   jax.ShapeDtypeStruct((bsz, PACK_W), F32)),
    )(enc_in, tvmask2, tvmask3, tpad3, feats_t, z, t3, sid_embs, fmask3,
      params['enc_w1'], params['enc_b1'], params['enc_wmu'], params['enc_bmu'],
      params['dp_w1'], params['dp_b1'], params['dp_w2'], params['dp_b2'],
      params['dp_wout'], params['dp_bout'],
      params['al_qw'], params['al_qb'], params['al_kw'], params['al_kb'],
      params['al_sqkw'], params['al_sqkb'],
      params['cond_wt'], params['cond_ws'], params['cond_b'],
      params['dec_w1'], params['dec_b1'], params['dec_w2'], params['dec_b2'])


# ---------------- parameters --------------------------------------------------
def init_params(key):
    ks = jax.random.split(key, 16)

    def nrm(k, shape, scale=0.1, dtype=F32):
        return (scale * jax.random.normal(k, shape)).astype(dtype)

    p = {}
    p['spk_table'] = nrm(ks[0], (N_SPEAKERS, SPK_DIM))                 # nn.Embedding
    p['token_emb'] = nrm(ks[1], (N_VOCAB, HID))                        # text embedding
    # text encoder MLP (bf16 MXU weights, f32 biases)
    p['enc_w1'] = nrm(ks[2], (HID + SPK_DIM, HID), dtype=BF16)
    p['enc_b1'] = jnp.zeros((1, HID), F32)
    p['enc_wmu'] = nrm(ks[3], (HID, NMEL), dtype=BF16)
    p['enc_bmu'] = jnp.zeros((1, NMEL), F32)
    # duration predictor conv weights, row-blocks [tap t-1; t; t+1]
    p['dp_w1'] = nrm(ks[4], (KSZ * NMEL, NMEL), dtype=BF16)
    p['dp_b1'] = jnp.zeros((1, NMEL), F32)
    p['dp_w2'] = nrm(ks[5], (KSZ * NMEL, NMEL), dtype=BF16)
    p['dp_b2'] = jnp.zeros((1, NMEL), F32)
    p['dp_wout'] = nrm(ks[6], (1, 1, NMEL))                            # head (reduction)
    p['dp_bout'] = jnp.zeros((1, 1), F32)
    # alignment encoder projections (speaker q/k fused into one matmul)
    p['al_qw'] = nrm(ks[7], (NMEL, NMEL), dtype=BF16)
    p['al_qb'] = jnp.zeros((1, NMEL), F32)
    p['al_kw'] = nrm(ks[8], (HID, NMEL), dtype=BF16)
    p['al_kb'] = jnp.zeros((1, NMEL), F32)
    p['al_sqkw'] = nrm(ks[9], (SPK_DIM, 2 * NMEL), dtype=BF16)         # [sq | sk]
    p['al_sqkb'] = jnp.zeros((1, 2 * NMEL), F32)
    # CFM decoder: time/speaker conditioning + conv estimator
    cond_w = nrm(ks[11], (1 + SPK_DIM, 2 * NMEL))
    p['cond_wt'] = cond_w[0:1, :]                                      # time row (f32)
    p['cond_ws'] = cond_w[1:, :].astype(BF16)                          # speaker rows
    p['cond_b'] = jnp.zeros((1, 2 * NMEL), F32)
    p['dec_w1'] = nrm(ks[12], (KSZ * 2 * NMEL, DEC_HID), dtype=BF16)
    p['dec_b1'] = jnp.zeros((1, DEC_HID), F32)
    p['dec_w2'] = nrm(ks[13], (KSZ * DEC_HID, NMEL), dtype=BF16)
    p['dec_b2'] = jnp.zeros((1, NMEL), F32)
    return p


def sequence_mask(lengths, maxlen):
    return jnp.arange(maxlen)[None, :] < lengths[:, None]


# ---------------- MatchaTTS.forward (training path, step < binarization) ----
@functools.partial(jax.jit, static_argnames=("step",))
def matcha_forward(params, text, text_lengths, feats, feats_lengths, sids,
                   duration=None, step=0, rng=None):
    bsz, t_txt = text.shape
    _, c_mel, t_mel = feats.shape

    # speaker embedding lookup (nn.Embedding)
    sid_embs = params['spk_table'][sids]                               # (B, S)

    # ---- input prep (tiny gathers / masks in XLA) ----
    # TODO(synk): full TextEncoder (prenet + transformer blocks) replaced by a
    #             token embedding + speaker-conditioned MLP with the same I/O.
    emb = params['token_emb'][text]                                    # (B, T_txt, H)
    spk_b = jnp.broadcast_to(sid_embs[:, None, :], (bsz, t_txt, SPK_DIM))
    enc_in = jnp.concatenate([emb, spk_b], axis=-1).reshape(
        bsz * t_txt, HID + SPK_DIM)
    txt_valid = sequence_mask(text_lengths, t_txt)                     # True = valid
    tvmask2 = txt_valid.reshape(bsz * t_txt, 1).astype(F32)
    tvmask3 = txt_valid[..., None].astype(F32)
    tpad3 = (~txt_valid)[:, None, :].astype(F32)
    feats_valid = sequence_mask(feats_lengths, t_mel)
    fmask3 = feats_valid[..., None].astype(F32)
    # TODO(synk): at production T_mel consume (B, C, T) directly in-kernel
    #             instead of this wrapper transpose (extra HBM round trip).
    feats_t = jnp.transpose(feats, (0, 2, 1))                          # (B, T_mel, C)
    k1, k2 = jax.random.split(rng)
    z = jax.random.normal(k1, (bsz, t_mel, c_mel), dtype=F32)          # channels-last
    t = jax.random.uniform(k2, (bsz, 1, 1), dtype=F32)                 # CFM time

    # ---- single fused Pallas kernel ----
    out_mel, out_txt = matcha_fused(params, enc_in, tvmask2, tvmask3, tpad3,
                                    feats_t, z, t, sid_embs, fmask3)

    # ---- unpack the lane-dense slabs ----
    c = c_mel
    o = 3 * c
    dec_t = out_mel[:, :, 0:c]
    u_t = out_mel[:, :, c:2 * c]
    mu_y_t = out_mel[:, :, 2 * c:o]
    attn_soft3 = out_mel[:, :, o:o + t_txt]
    attn_logp3 = out_mel[:, :, o + t_txt:o + 2 * t_txt]
    attn_hard3 = out_mel[:, :, o + 2 * t_txt:o + 3 * t_txt]
    log_duration_prediction = out_txt[:, 0:t_txt]
    attn_hard_dur = out_txt[:, t_txt:2 * t_txt]
    duration_rounded = attn_hard_dur.astype(jnp.int32)

    # mu_y: soft-attention expansion (duration given, step < binarization start)
    # TODO(synk): Gaussian/length-regulator mu_y branches not implemented
    #             (training soft-attention path only).
    dec_outs = jnp.transpose(dec_t, (0, 2, 1))                         # (B, C, T_mel)
    u = jnp.transpose(u_t, (0, 2, 1))
    mu_y = jnp.transpose(mu_y_t, (0, 2, 1))

    txt_mask = (~txt_valid)[:, None, :]                                # pad mask
    feats_mask = feats_valid[:, None, :]                               # (B,1,T_mel)
    attn_out = (attn_soft3[:, None], attn_hard3[:, None], attn_hard_dur,
                attn_logp3[:, None])

    accent_probs = None  # use_cvae=False path
    return (dec_outs, u, mu_y, txt_mask, feats_mask, feats_lengths,
            duration_rounded, log_duration_prediction, attn_out, accent_probs)


# ---------------- demo ---------------------------------------------------------
if __name__ == "__main__":
    key = jax.random.PRNGKey(0)
    kp, kt, kf = jax.random.split(key, 3)
    params = init_params(kp)

    text = jax.random.randint(kt, (B, T_TXT), 0, N_VOCAB, dtype=jnp.int32)
    text_lengths = jnp.array([T_TXT, T_TXT - 2], dtype=jnp.int32)
    feats = jax.random.normal(kf, (B, NMEL, T_MEL), dtype=F32)
    feats_lengths = jnp.array([T_MEL, T_MEL - 4], dtype=jnp.int32)
    sids = jnp.array([0, 1], dtype=jnp.int32)
    duration = jnp.ones((B, T_TXT), dtype=jnp.int32)  # enables soft-attn mu_y path

    outs = matcha_forward(params, text, text_lengths, feats, feats_lengths,
                          sids, duration=duration, step=0,
                          rng=jax.random.PRNGKey(0))
    jax.block_until_ready(outs[0])
    jax.block_until_ready(outs[1])
    print("KERNEL_OK")
</pallas_src>

<mosaic_0001>
module attributes {stable_mosaic.version = 11 : i64} {
  func.func @_matcha_kernel(%arg0: memref<16x48xf32, #tpu.memory_space<vmem>>, %arg1: memref<16x1xf32, #tpu.memory_space<vmem>>, %arg2: memref<2x8x1xf32, #tpu.memory_space<vmem>>, %arg3: memref<2x1x8xf32, #tpu.memory_space<vmem>>, %arg4: memref<2x16x16xf32, #tpu.memory_space<vmem>>, %arg5: memref<2x16x16xf32, #tpu.memory_space<vmem>>, %arg6: memref<2x1x1xf32, #tpu.memory_space<vmem>>, %arg7: memref<2x16xf32, #tpu.memory_space<vmem>>, %arg8: memref<2x16x1xf32, #tpu.memory_space<vmem>>, %arg9: memref<48x32xbf16, #tpu.memory_space<vmem>>, %arg10: memref<1x32xf32, #tpu.memory_space<vmem>>, %arg11: memref<32x16xbf16, #tpu.memory_space<vmem>>, %arg12: memref<1x16xf32, #tpu.memory_space<vmem>>, %arg13: memref<48x16xbf16, #tpu.memory_space<vmem>>, %arg14: memref<1x16xf32, #tpu.memory_space<vmem>>, %arg15: memref<48x16xbf16, #tpu.memory_space<vmem>>, %arg16: memref<1x16xf32, #tpu.memory_space<vmem>>, %arg17: memref<1x1x16xf32, #tpu.memory_space<vmem>>, %arg18: memref<1x1xf32, #tpu.memory_space<vmem>>, %arg19: memref<16x16xbf16, #tpu.memory_space<vmem>>, %arg20: memref<1x16xf32, #tpu.memory_space<vmem>>, %arg21: memref<32x16xbf16, #tpu.memory_space<vmem>>, %arg22: memref<1x16xf32, #tpu.memory_space<vmem>>, %arg23: memref<16x32xbf16, #tpu.memory_space<vmem>>, %arg24: memref<1x32xf32, #tpu.memory_space<vmem>>, %arg25: memref<1x32xf32, #tpu.memory_space<vmem>>, %arg26: memref<16x32xbf16, #tpu.memory_space<vmem>>, %arg27: memref<1x32xf32, #tpu.memory_space<vmem>>, %arg28: memref<96x32xbf16, #tpu.memory_space<vmem>>, %arg29: memref<1x32xf32, #tpu.memory_space<vmem>>, %arg30: memref<96x16xbf16, #tpu.memory_space<vmem>>, %arg31: memref<1x16xf32, #tpu.memory_space<vmem>>, %arg32: memref<2x16x128xf32, #tpu.memory_space<vmem>>, %arg33: memref<2x128xf32, #tpu.memory_space<vmem>>) attributes {dimension_semantics = [], scalar_prefetch = 0 : i64, scratch_operands = 0 : i64, tpu.core_type = #tpu.core_type<tc>} {
    %c0 = arith.constant 0 : index
    %c0_0 = arith.constant 0 : index
    %0 = vector.load %arg1[%c0, %c0_0] : memref<16x1xf32, #tpu.memory_space<vmem>>, vector<16x1xf32>
    %c0_1 = arith.constant 0 : index
    %c0_2 = arith.constant 0 : index
    %1 = vector.load %arg0[%c0_1, %c0_2] : memref<16x48xf32, #tpu.memory_space<vmem>>, vector<16x48xf32>
    %2 = arith.truncf %1 : vector<16x48xf32> to vector<16x48xbf16>
    %c0_3 = arith.constant 0 : index
    %c0_4 = arith.constant 0 : index
    %3 = vector.load %arg9[%c0_3, %c0_4] : memref<48x32xbf16, #tpu.memory_space<vmem>>, vector<48x32xbf16>
    %cst = arith.constant dense<0.000000e+00> : vector<16x32xf32>
    %4 = tpu.matmul %2, %3, %cst {dimension_numbers = #tpu.dot_dimension_numbers<[1], [0], [0], [1], [0, 0, 1, 1], [], []>} : vector<16x48xbf16>, vector<48x32xbf16>, vector<16x32xf32> -> vector<16x32xf32>
    %c0_5 = arith.constant 0 : index
    %c0_6 = arith.constant 0 : index
    %5 = vector.load %arg10[%c0_5, %c0_6] : memref<1x32xf32, #tpu.memory_space<vmem>>, vector<1x32xf32>
    %6 = vector.broadcast %5 : vector<1x32xf32> to vector<16x32xf32>
    %7 = arith.addf %4, %6 : vector<16x32xf32>
    %cst_7 = arith.constant 0.000000e+00 : f32
    %8 = vector.broadcast %cst_7 : f32 to vector<16x32xf32>
    %9 = arith.maximumf %7, %8 : vector<16x32xf32>
    %10 = vector.broadcast %0 : vector<16x1xf32> to vector<16x32xf32>
    %11 = arith.mulf %9, %10 : vector<16x32xf32>
    %12 = arith.truncf %11 : vector<16x32xf32> to vector<16x32xbf16>
    %c0_8 = arith.constant 0 : index
    %c0_9 = arith.constant 0 : index
    %13 = vector.load %arg11[%c0_8, %c0_9] : memref<32x16xbf16, #tpu.memory_space<vmem>>, vector<32x16xbf16>
    %cst_10 = arith.constant dense<0.000000e+00> : vector<16x16xf32>
    %14 = tpu.matmul %12, %13, %cst_10 {dimension_numbers = #tpu.dot_dimension_numbers<[1], [0], [0], [1], [0, 0, 1, 1], [], []>} : vector<16x32xbf16>, vector<32x16xbf16>, vector<16x16xf32> -> vector<16x16xf32>
    %c0_11 = arith.constant 0 : index
    %c0_12 = arith.constant 0 : index
    %15 = vector.load %arg12[%c0_11, %c0_12] : memref<1x16xf32, #tpu.memory_space<vmem>>, vector<1x16xf32>
    %16 = vector.broadcast %15 : vector<1x16xf32> to vector<16x16xf32>
    %17 = arith.addf %14, %16 : vector<16x16xf32>
    %18 = vector.broadcast %0 : vector<16x1xf32> to vector<16x16xf32>
    %19 = arith.mulf %17, %18 : vector<16x16xf32>
    %20 = vector.shape_cast %19 : vector<16x16xf32> to vector<2x8x16xf32>
    %c0_13 = arith.constant 0 : index
    %c0_14 = arith.constant 0 : index
    %c0_15 = arith.constant 0 : index
    %21 = vector.load %arg2[%c0_13, %c0_14, %c0_15] : memref<2x8x1xf32, #tpu.memory_space<vmem>>, vector<2x8x1xf32>
    %22 = vector.broadcast %21 : vector<2x8x1xf32> to vector<2x8x16xf32>
    %23 = arith.mulf %20, %22 : vector<2x8x16xf32>
    %cst_16 = arith.constant 0.000000e+00 : f32
    %24 = vector.broadcast %cst_16 : f32 to vector<2x1x16xf32>
    %25 = vector.extract_strided_slice %23 {offsets = [0, 0, 0], sizes = [2, 7, 16], strides = [1, 1, 1]} : vector<2x8x16xf32> to vector<2x7x16xf32>
    %26 = tpu.concatenate %24, %25 in 1 : vector<2x1x16xf32>, vector<2x7x16xf32> -> vector<2x8x16xf32>
    %27 = vector.extract_strided_slice %23 {offsets = [0, 1, 0], sizes = [2, 7, 16], strides = [1, 1, 1]} : vector<2x8x16xf32> to vector<2x7x16xf32>
    %28 = tpu.concatenate %27, %24 in 1 : vector<2x7x16xf32>, vector<2x1x16xf32> -> vector<2x8x16xf32>
    %c0_17 = arith.constant 0 : index
    %c0_18 = arith.constant 0 : index
    %29 = vector.load %arg14[%c0_17, %c0_18] : memref<1x16xf32, #tpu.memory_space<vmem>>, vector<1x16xf32>
    %30 = vector.shape_cast %26 : vector<2x8x16xf32> to vector<16x16xf32>
    %31 = arith.truncf %30 : vector<16x16xf32> to vector<16x16xbf16>
    %c0_19 = arith.constant 0 : index
    %c0_20 = arith.constant 0 : index
    %32 = vector.load %arg13[%c0_19, %c0_20] : memref<48x16xbf16, #tpu.memory_space<vmem>>, vector<16x16xbf16>
    %cst_21 = arith.constant dense<0.000000e+00> : vector<16x16xf32>
    %33 = tpu.matmul %31, %32, %cst_21 {dimension_numbers = #tpu.dot_dimension_numbers<[1], [0], [0], [1], [0, 0, 1, 1], [], []>} : vector<16x16xbf16>, vector<16x16xbf16>, vector<16x16xf32> -> vector<16x16xf32>
    %34 = vector.broadcast %29 : vector<1x16xf32> to vector<16x16xf32>
    %35 = arith.addf %34, %33 : vector<16x16xf32>
    %36 = vector.shape_cast %23 : vector<2x8x16xf32> to vector<16x16xf32>
    %37 = arith.truncf %36 : vector<16x16xf32> to vector<16x16xbf16>
    %c16 = arith.constant 16 : index
    %c0_22 = arith.constant 0 : index
    %38 = vector.load %arg13[%c16, %c0_22] : memref<48x16xbf16, #tpu.memory_space<vmem>>, vector<16x16xbf16>
    %cst_23 = arith.constant dense<0.000000e+00> : vector<16x16xf32>
    %39 = tpu.matmul %37, %38, %cst_23 {dimension_numbers = #tpu.dot_dimension_numbers<[1], [0], [0], [1], [0, 0, 1, 1], [], []>} : vector<16x16xbf16>, vector<16x16xbf16>, vector<16x16xf32> -> vector<16x16xf32>
    %40 = arith.addf %35, %39 : vector<16x16xf32>
    %41 = vector.shape_cast %28 : vector<2x8x16xf32> to vector<16x16xf32>
    %42 = arith.truncf %41 : vector<16x16xf32> to vector<16x16xbf16>
    %c32 = arith.constant 32 : index
    %c0_24 = arith.constant 0 : index
    %43 = vector.load %arg13[%c32, %c0_24] : memref<48x16xbf16, #tpu.memory_space<vmem>>, vector<16x16xbf16>
    %cst_25 = arith.constant dense<0.000000e+00> : vector<16x16xf32>
    %44 = tpu.matmul %42, %43, %cst_25 {dimension_numbers = #tpu.dot_dimension_numbers<[1], [0], [0], [1], [0, 0, 1, 1], [], []>} : vector<16x16xbf16>, vector<16x16xbf16>, vector<16x16xf32> -> vector<16x16xf32>
    %45 = arith.addf %40, %44 : vector<16x16xf32>
    %46 = vector.shape_cast %45 : vector<16x16xf32> to vector<2x8x16xf32>
    %cst_26 = arith.constant 0.000000e+00 : f32
    %47 = vector.broadcast %cst_26 : f32 to vector<2x8x16xf32>
    %48 = arith.maximumf %46, %47 : vector<2x8x16xf32>
    %49 = vector.broadcast %21 : vector<2x8x1xf32> to vector<2x8x16xf32>
    %50 = arith.mulf %48, %49 : vector<2x8x16xf32>
    %cst_27 = arith.constant 0.000000e+00 : f32
    %51 = vector.broadcast %cst_27 : f32 to vector<2x1x16xf32>
    %52 = vector.extract_strided_slice %50 {offsets = [0, 0, 0], sizes = [2, 7, 16], strides = [1, 1, 1]} : vector<2x8x16xf32> to vector<2x7x16xf32>
    %53 = tpu.concatenate %51, %52 in 1 : vector<2x1x16xf32>, vector<2x7x16xf32> -> vector<2x8x16xf32>
    %54 = vector.extract_strided_slice %50 {offsets = [0, 1, 0], sizes = [2, 7, 16], strides = [1, 1, 1]} : vector<2x8x16xf32> to vector<2x7x16xf32>
    %55 = tpu.concatenate %54, %51 in 1 : vector<2x7x16xf32>, vector<2x1x16xf32> -> vector<2x8x16xf32>
    %c0_28 = arith.constant 0 : index
    %c0_29 = arith.constant 0 : index
    %56 = vector.load %arg16[%c0_28, %c0_29] : memref<1x16xf32, #tpu.memory_space<vmem>>, vector<1x16xf32>
    %57 = vector.shape_cast %53 : vector<2x8x16xf32> to vector<16x16xf32>
    %58 = arith.truncf %57 : vector<16x16xf32> to vector<16x16xbf16>
    %c0_30 = arith.constant 0 : index
    %c0_31 = arith.constant 0 : index
    %59 = vector.load %arg15[%c0_30, %c0_31] : memref<48x16xbf16, #tpu.memory_space<vmem>>, vector<16x16xbf16>
    %cst_32 = arith.constant dense<0.000000e+00> : vector<16x16xf32>
    %60 = tpu.matmul %58, %59, %cst_32 {dimension_numbers = #tpu.dot_dimension_numbers<[1], [0], [0], [1], [0, 0, 1, 1], [], []>} : vector<16x16xbf16>, vector<16x16xbf16>, vector<16x16xf32> -> vector<16x16xf32>
    %61 = vector.broadcast %56 : vector<1x16xf32> to vector<16x16xf32>
    %62 = arith.addf %61, %60 : vector<16x16xf32>
    %63 = vector.shape_cast %50 : vector<2x8x16xf32> to vector<16x16xf32>
    %64 = arith.truncf %63 : vector<16x16xf32> to vector<16x16xbf16>
    %c16_33 = arith.constant 16 : index
    %c0_34 = arith.constant 0 : index
    %65 = vector.load %arg15[%c16_33, %c0_34] : memref<48x16xbf16, #tpu.memory_space<vmem>>, vector<16x16xbf16>
    %cst_35 = arith.constant dense<0.000000e+00> : vector<16x16xf32>
    %66 = tpu.matmul %64, %65, %cst_35 {dimension_numbers = #tpu.dot_dimension_numbers<[1], [0], [0], [1], [0, 0, 1, 1], [], []>} : vector<16x16xbf16>, vector<16x16xbf16>, vector<16x16xf32> -> vector<16x16xf32>
    %67 = arith.addf %62, %66 : vector<16x16xf32>
    %68 = vector.shape_cast %55 : vector<2x8x16xf32> to vector<16x16xf32>
    %69 = arith.truncf %68 : vector<16x16xf32> to vector<16x16xbf16>
    %c32_36 = arith.constant 32 : index
    %c0_37 = arith.constant 0 : index
    %70 = vector.load %arg15[%c32_36, %c0_37] : memref<48x16xbf16, #tpu.memory_space<vmem>>, vector<16x16xbf16>
    %cst_38 = arith.constant dense<0.000000e+00> : vector<16x16xf32>
    %71 = tpu.matmul %69, %70, %cst_38 {dimension_numbers = #tpu.dot_dimension_numbers<[1], [0], [0], [1], [0, 0, 1, 1], [], []>} : vector<16x16xbf16>, vector<16x16xbf16>, vector<16x16xf32> -> vector<16x16xf32>
    %72 = arith.addf %67, %71 : vector<16x16xf32>
    %73 = vector.shape_cast %72 : vector<16x16xf32> to vector<2x8x16xf32>
    %cst_39 = arith.constant 0.000000e+00 : f32
    %74 = vector.broadcast %cst_39 : f32 to vector<2x8x16xf32>
    %75 = arith.maximumf %73, %74 : vector<2x8x16xf32>
    %76 = vector.broadcast %21 : vector<2x8x1xf32> to vector<2x8x16xf32>
    %77 = arith.mulf %75, %76 : vector<2x8x16xf32>
    %c0_40 = arith.constant 0 : index
    %c0_41 = arith.constant 0 : index
    %c0_42 = arith.constant 0 : index
    %78 = vector.load %arg17[%c0_40, %c0_41, %c0_42] : memref<1x1x16xf32, #tpu.memory_space<vmem>>, vector<1x1x16xf32>
    %79 = vector.broadcast %78 : vector<1x1x16xf32> to vector<2x8x16xf32>
    %80 = arith.mulf %77, %79 : vector<2x8x16xf32>
    %cst_43 = arith.constant dense<0.000000e+00> : vector<2x8xf32>
    %81 = vector.multi_reduction <add>, %80, %cst_43 [2] : vector<2x8x16xf32> to vector<2x8xf32>
    %c0_44 = arith.constant 0 : index
    %c0_45 = arith.constant 0 : index
    %82 = vector.load %arg18[%c0_44, %c0_45] : memref<1x1xf32, #tpu.memory_space<vmem>>, vector<1x1xf32>
    %83 = vector.broadcast %82 : vector<1x1xf32> to vector<2x8xf32>
    %84 = arith.addf %81, %83 : vector<2x8xf32>
    %85 = vector.shape_cast %21 : vector<2x8x1xf32> to vector<2x8xf32>
    %86 = arith.mulf %84, %85 : vector<2x8xf32>
    %c0_46 = arith.constant 0 : index
    %c0_47 = arith.constant 0 : index
    %87 = vector.load %arg7[%c0_46, %c0_47] : memref<2x16xf32, #tpu.memory_space<vmem>>, vector<2x16xf32>
    %88 = arith.truncf %87 : vector<2x16xf32> to vector<2x16xbf16>
    %c0_48 = arith.constant 0 : index
    %c0_49 = arith.constant 0 : index
    %89 = vector.load %arg23[%c0_48, %c0_49] : memref<16x32xbf16, #tpu.memory_space<vmem>>, vector<16x32xbf16>
    %cst_50 = arith.constant dense<0.000000e+00> : vector<2x32xf32>
    %90 = tpu.matmul %88, %89, %cst_50 {dimension_numbers = #tpu.dot_dimension_numbers<[1], [0], [0], [1], [0, 0, 1, 1], [], []>} : vector<2x16xbf16>, vector<16x32xbf16>, vector<2x32xf32> -> vector<2x32xf32>
    %c0_51 = arith.constant 0 : index
    %c0_52 = arith.constant 0 : index
    %91 = vector.load %arg24[%c0_51, %c0_52] : memref<1x32xf32, #tpu.memory_space<vmem>>, vector<1x32xf32>
    %92 = vector.broadcast %91 : vector<1x32xf32> to vector<2x32xf32>
    %93 = arith.addf %90, %92 : vector<2x32xf32>
    %94 = vector.extract_strided_slice %93 {offsets = [0, 0], sizes = [2, 16], strides = [1, 1]} : vector<2x32xf32> to vector<2x16xf32>
    %95 = vector.shape_cast %94 : vector<2x16xf32> to vector<2x1x16xf32>
    %96 = vector.extract_strided_slice %93 {offsets = [0, 16], sizes = [2, 16], strides = [1, 1]} : vector<2x32xf32> to vector<2x16xf32>
    %97 = vector.shape_cast %96 : vector<2x16xf32> to vector<2x1x16xf32>
    %c0_53 = arith.constant 0 : index
    %c0_54 = arith.constant 0 : index
    %c0_55 = arith.constant 0 : index
    %98 = vector.load %arg4[%c0_53, %c0_54, %c0_55] : memref<2x16x16xf32, #tpu.memory_space<vmem>>, vector<2x16x16xf32>
    %99 = vector.shape_cast %98 : vector<2x16x16xf32> to vector<32x16xf32>
    %100 = arith.truncf %99 : vector<32x16xf32> to vector<32x16xbf16>
    %c0_56 = arith.constant 0 : index
    %c0_57 = arith.constant 0 : index
    %101 = vector.load %arg19[%c0_56, %c0_57] : memref<16x16xbf16, #tpu.memory_space<vmem>>, vector<16x16xbf16>
    %cst_58 = arith.constant dense<0.000000e+00> : vector<32x16xf32>
    %102 = tpu.matmul %100, %101, %cst_58 {dimension_numbers = #tpu.dot_dimension_numbers<[1], [0], [0], [1], [0, 0, 1, 1], [], []>} : vector<32x16xbf16>, vector<16x16xbf16>, vector<32x16xf32> -> vector<32x16xf32>
    %c0_59 = arith.constant 0 : index
    %c0_60 = arith.constant 0 : index
    %103 = vector.load %arg20[%c0_59, %c0_60] : memref<1x16xf32, #tpu.memory_space<vmem>>, vector<1x16xf32>
    %104 = vector.broadcast %103 : vector<1x16xf32> to vector<32x16xf32>
    %105 = arith.addf %102, %104 : vector<32x16xf32>
    %106 = vector.shape_cast %105 : vector<32x16xf32> to vector<2x16x16xf32>
    %107 = vector.broadcast %95 : vector<2x1x16xf32> to vector<2x16x16xf32>
    %108 = arith.addf %106, %107 : vector<2x16x16xf32>
    %c0_61 = arith.constant 0 : index
    %c0_62 = arith.constant 0 : index
    %109 = vector.load %arg21[%c0_61, %c0_62] : memref<32x16xbf16, #tpu.memory_space<vmem>>, vector<32x16xbf16>
    %cst_63 = arith.constant dense<0.000000e+00> : vector<16x16xf32>
    %110 = tpu.matmul %12, %109, %cst_63 {dimension_numbers = #tpu.dot_dimension_numbers<[1], [0], [0], [1], [0, 0, 1, 1], [], []>} : vector<16x32xbf16>, vector<32x16xbf16>, vector<16x16xf32> -> vector<16x16xf32>
    %c0_64 = arith.constant 0 : index
    %c0_65 = arith.constant 0 : index
    %111 = vector.load %arg22[%c0_64, %c0_65] : memref<1x16xf32, #tpu.memory_space<vmem>>, vector<1x16xf32>
    %112 = vector.broadcast %111 : vector<1x16xf32> to vector<16x16xf32>
    %113 = arith.addf %110, %112 : vector<16x16xf32>
    %114 = vector.shape_cast %113 : vector<16x16xf32> to vector<2x8x16xf32>
    %115 = vector.broadcast %97 : vector<2x1x16xf32> to vector<2x8x16xf32>
    %116 = arith.addf %114, %115 : vector<2x8x16xf32>
    %117 = arith.mulf %108, %108 : vector<2x16x16xf32>
    %cst_66 = arith.constant dense<0.000000e+00> : vector<2x16xf32>
    %118 = vector.multi_reduction <add>, %117, %cst_66 [2] : vector<2x16x16xf32> to vector<2x16xf32>
    %119 = vector.shape_cast %118 : vector<2x16xf32> to vector<2x16x1xf32>
    %120 = arith.mulf %116, %116 : vector<2x8x16xf32>
    %cst_67 = arith.constant dense<0.000000e+00> : vector<2x8xf32>
    %121 = vector.multi_reduction <add>, %120, %cst_67 [2] : vector<2x8x16xf32> to vector<2x8xf32>
    %122 = vector.shape_cast %121 : vector<2x8xf32> to vector<2x1x8xf32>
    "tpu.trace_start"() <{level = 10 : i32, message = "bmd,bnd->bmn"}> : () -> ()
    %cst_68 = arith.constant dense<0.000000e+00> : vector<2x16x8xf32>
    %123 = tpu.matmul %108, %116, %cst_68 {dimension_numbers = #tpu.dot_dimension_numbers<[2], [2], [1], [1], [0, 0, 0, 1, 1, 1], [0], [0]>} : vector<2x16x16xf32>, vector<2x8x16xf32>, vector<2x16x8xf32> -> vector<2x16x8xf32>
    "tpu.trace_stop"() : () -> ()
    %124 = vector.broadcast %119 : vector<2x16x1xf32> to vector<2x16x8xf32>
    %125 = vector.broadcast %122 : vector<2x1x8xf32> to vector<2x16x8xf32>
    %126 = arith.addf %124, %125 : vector<2x16x8xf32>
    %cst_69 = arith.constant 2.000000e+00 : f32
    %127 = vector.broadcast %cst_69 : f32 to vector<2x16x8xf32>
    %128 = arith.mulf %127, %123 : vector<2x16x8xf32>
    %129 = arith.subf %126, %128 : vector<2x16x8xf32>
    %cst_70 = arith.constant -5.000000e-04 : f32
    %130 = vector.broadcast %cst_70 : f32 to vector<2x16x8xf32>
    %131 = arith.mulf %130, %129 : vector<2x16x8xf32>
    %c0_71 = arith.constant 0 : index
    %c0_72 = arith.constant 0 : index
    %c0_73 = arith.constant 0 : index
    %132 = vector.load %arg3[%c0_71, %c0_72, %c0_73] : memref<2x1x8xf32, #tpu.memory_space<vmem>>, vector<2x1x8xf32>
    %cst_74 = arith.constant 1.000000e+09 : f32
    %133 = vector.broadcast %cst_74 : f32 to vector<2x1x8xf32>
    %134 = arith.mulf %133, %132 : vector<2x1x8xf32>
    %135 = vector.broadcast %134 : vector<2x1x8xf32> to vector<2x16x8xf32>
    %136 = arith.subf %131, %135 : vector<2x16x8xf32>
    %cst_75 = arith.constant dense<0xFF800000> : vector<2x16xf32>
    %137 = vector.multi_reduction <maximumf>, %136, %cst_75 [2] : vector<2x16x8xf32> to vector<2x16xf32>
    %138 = vector.shape_cast %137 : vector<2x16xf32> to vector<2x16x1xf32>
    %139 = vector.broadcast %138 : vector<2x16x1xf32> to vector<2x16x8xf32>
    %140 = arith.subf %136, %139 : vector<2x16x8xf32>
    %141 = math.exp %140 : vector<2x16x8xf32>
    %cst_76 = arith.constant dense<0.000000e+00> : vector<2x16xf32>
    %142 = vector.multi_reduction <add>, %141, %cst_76 [2] : vector<2x16x8xf32> to vector<2x16xf32>
    %143 = vector.shape_cast %142 : vector<2x16xf32> to vector<2x16x1xf32>
    %144 = tpu.reciprocal %143 {approx = true} : vector<2x16x1xf32> -> vector<2x16x1xf32>
    %145 = vector.broadcast %144 : vector<2x16x1xf32> to vector<2x16x8xf32>
    %146 = arith.mulf %141, %145 : vector<2x16x8xf32>
    %147 = math.log %143 : vector<2x16x1xf32>
    %148 = arith.addf %138, %147 : vector<2x16x1xf32>
    %149 = vector.broadcast %148 : vector<2x16x1xf32> to vector<2x16x8xf32>
    %150 = arith.subf %136, %149 : vector<2x16x8xf32>
    %c0_77 = arith.constant 0 : index
    %c0_78 = arith.constant 0 : index
    %c0_79 = arith.constant 0 : index
    %151 = vector.load %arg8[%c0_77, %c0_78, %c0_79] : memref<2x16x1xf32, #tpu.memory_space<vmem>>, vector<2x16x1xf32>
    %152 = tpu.iota {dimensions = array<i32: 2>} : vector<2x16x8xi32>
    %153 = vector.broadcast %138 : vector<2x16x1xf32> to vector<2x16x8xf32>
    %154 = arith.cmpf oge, %136, %153 : vector<2x16x8xf32>
    %c0_i32 = arith.constant 0 : i32
    %155 = vector.broadcast %c0_i32 : i32 to vector<2x16x8xi32>
    %156 = arith.subi %155, %152 : vector<2x16x8xi32>
    %c-8_i32 = arith.constant -8 : i32
    %157 = vector.broadcast %c-8_i32 : i32 to vector<2x16x8xi32>
    %158 = arith.select %154, %156, %157 : vector<2x16x8xi1>, vector<2x16x8xi32>
    %cst_80 = arith.constant dense<-2147483648> : vector<2x16xi32>
    %159 = vector.multi_reduction <maxsi>, %158, %cst_80 [2] : vector<2x16x8xi32> to vector<2x16xi32>
    %160 = vector.shape_cast %159 : vector<2x16xi32> to vector<2x16x1xi32>
    %c0_i32_81 = arith.constant 0 : i32
    %161 = vector.broadcast %c0_i32_81 : i32 to vector<2x16x1xi32>
    %162 = arith.subi %161, %160 : vector<2x16x1xi32>
    %163 = vector.broadcast %162 : vector<2x16x1xi32> to vector<2x16x8xi32>
    %164 = arith.cmpi eq, %152, %163 : vector<2x16x8xi32>
    %165 = arith.extui %164 : vector<2x16x8xi1> to vector<2x16x8xi32>
    %166 = arith.sitofp %165 : vector<2x16x8xi32> to vector<2x16x8xf32>
    %167 = vector.broadcast %151 : vector<2x16x1xf32> to vector<2x16x8xf32>
    %168 = arith.mulf %166, %167 : vector<2x16x8xf32>
    %cst_82 = arith.constant dense<0.000000e+00> : vector<2x8xf32>
    %169 = vector.multi_reduction <add>, %168, %cst_82 [1] : vector<2x16x8xf32> to vector<2x8xf32>
    %170 = arith.truncf %146 : vector<2x16x8xf32> to vector<2x16x8xbf16>
    %171 = arith.truncf %20 : vector<2x8x16xf32> to vector<2x8x16xbf16>
    "tpu.trace_start"() <{level = 10 : i32, message = "bmn,bnd->bmd"}> : () -> ()
    %cst_83 = arith.constant dense<0.000000e+00> : vector<2x16x16xf32>
    %172 = tpu.matmul %170, %171, %cst_83 {dimension_numbers = #tpu.dot_dimension_numbers<[2], [1], [1], [2], [0, 0, 0, 1, 1, 2], [0], [0]>} : vector<2x16x8xbf16>, vector<2x8x16xbf16>, vector<2x16x16xf32> -> vector<2x16x16xf32>
    "tpu.trace_stop"() : () -> ()
    %c0_84 = arith.constant 0 : index
    %c0_85 = arith.constant 0 : index
    %c0_86 = arith.constant 0 : index
    %173 = vector.load %arg4[%c0_84, %c0_85, %c0_86] : memref<2x16x16xf32, #tpu.memory_space<vmem>>, vector<2x16x16xf32>
    %c0_87 = arith.constant 0 : index
    %c0_88 = arith.constant 0 : index
    %c0_89 = arith.constant 0 : index
    %174 = vector.load %arg5[%c0_87, %c0_88, %c0_89] : memref<2x16x16xf32, #tpu.memory_space<vmem>>, vector<2x16x16xf32>
    %cst_90 = arith.constant 0.999899983 : f32
    %175 = vector.broadcast %cst_90 : f32 to vector<2x16x16xf32>
    %176 = arith.mulf %175, %174 : vector<2x16x16xf32>
    %177 = arith.subf %173, %176 : vector<2x16x16xf32>
    %178 = vector.broadcast %151 : vector<2x16x1xf32> to vector<2x16x16xf32>
    %179 = arith.mulf %177, %178 : vector<2x16x16xf32>
    %c0_91 = arith.constant 0 : index
    %c0_92 = arith.constant 0 : index
    %c0_93 = arith.constant 0 : index
    %180 = vector.load %arg6[%c0_91, %c0_92, %c0_93] : memref<2x1x1xf32, #tpu.memory_space<vmem>>, vector<2x1x1xf32>
    %181 = vector.shape_cast %180 : vector<2x1x1xf32> to vector<2x1x1xf32>
    %182 = vector.broadcast %181 : vector<2x1x1xf32> to vector<2x16x1xf32>
    %cst_94 = arith.constant 0.999899983 : f32
    %183 = vector.broadcast %cst_94 : f32 to vector<2x16x1xf32>
    %184 = arith.mulf %183, %182 : vector<2x16x1xf32>
    %cst_95 = arith.constant 1.000000e+00 : f32
    %185 = vector.broadcast %cst_95 : f32 to vector<2x16x1xf32>
    %186 = arith.subf %185, %184 : vector<2x16x1xf32>
    %187 = vector.broadcast %186 : vector<2x16x1xf32> to vector<2x16x16xf32>
    %188 = arith.mulf %187, %174 : vector<2x16x16xf32>
    %189 = vector.broadcast %182 : vector<2x16x1xf32> to vector<2x16x16xf32>
    %190 = arith.mulf %189, %173 : vector<2x16x16xf32>
    %191 = arith.addf %188, %190 : vector<2x16x16xf32>
    %c0_96 = arith.constant 0 : index
    %c0_97 = arith.constant 0 : index
    %192 = vector.load %arg26[%c0_96, %c0_97] : memref<16x32xbf16, #tpu.memory_space<vmem>>, vector<16x32xbf16>
    %cst_98 = arith.constant dense<0.000000e+00> : vector<2x32xf32>
    %193 = tpu.matmul %88, %192, %cst_98 {dimension_numbers = #tpu.dot_dimension_numbers<[1], [0], [0], [1], [0, 0, 1, 1], [], []>} : vector<2x16xbf16>, vector<16x32xbf16>, vector<2x32xf32> -> vector<2x32xf32>
    %c0_99 = arith.constant 0 : index
    %c0_100 = arith.constant 0 : index
    %194 = vector.load %arg27[%c0_99, %c0_100] : memref<1x32xf32, #tpu.memory_space<vmem>>, vector<1x32xf32>
    %195 = vector.broadcast %194 : vector<1x32xf32> to vector<2x32xf32>
    %196 = arith.addf %193, %195 : vector<2x32xf32>
    %c0_101 = arith.constant 0 : index
    %c0_102 = arith.constant 0 : index
    %c0_103 = arith.constant 0 : index
    %197 = vector.load %arg6[%c0_101, %c0_102, %c0_103] : memref<2x1x1xf32, #tpu.memory_space<vmem>>, vector<2x1x1xf32>
    %c0_104 = arith.constant 0 : index
    %c0_105 = arith.constant 0 : index
    %198 = vector.load %arg25[%c0_104, %c0_105] : memref<1x32xf32, #tpu.memory_space<vmem>>, vector<1x32xf32>
    %199 = vector.shape_cast %198 : vector<1x32xf32> to vector<1x1x32xf32>
    %200 = vector.broadcast %197 : vector<2x1x1xf32> to vector<2x1x32xf32>
    %201 = vector.broadcast %199 : vector<1x1x32xf32> to vector<2x1x32xf32>
    %202 = arith.mulf %200, %201 : vector<2x1x32xf32>
    %203 = vector.shape_cast %196 : vector<2x32xf32> to vector<2x1x32xf32>
    %204 = arith.addf %202, %203 : vector<2x1x32xf32>
    %205 = tpu.concatenate %191, %172 in 2 : vector<2x16x16xf32>, vector<2x16x16xf32> -> vector<2x16x32xf32>
    %206 = vector.broadcast %204 : vector<2x1x32xf32> to vector<2x16x32xf32>
    %207 = arith.addf %205, %206 : vector<2x16x32xf32>
    %cst_106 = arith.constant 0.000000e+00 : f32
    %208 = vector.broadcast %cst_106 : f32 to vector<2x1x32xf32>
    %209 = vector.extract_strided_slice %207 {offsets = [0, 0, 0], sizes = [2, 15, 32], strides = [1, 1, 1]} : vector<2x16x32xf32> to vector<2x15x32xf32>
    %210 = tpu.concatenate %208, %209 in 1 : vector<2x1x32xf32>, vector<2x15x32xf32> -> vector<2x16x32xf32>
    %211 = vector.extract_strided_slice %207 {offsets = [0, 1, 0], sizes = [2, 15, 32], strides = [1, 1, 1]} : vector<2x16x32xf32> to vector<2x15x32xf32>
    %212 = tpu.concatenate %211, %208 in 1 : vector<2x15x32xf32>, vector<2x1x32xf32> -> vector<2x16x32xf32>
    %c0_107 = arith.constant 0 : index
    %c0_108 = arith.constant 0 : index
    %213 = vector.load %arg29[%c0_107, %c0_108] : memref<1x32xf32, #tpu.memory_space<vmem>>, vector<1x32xf32>
    %214 = vector.shape_cast %210 : vector<2x16x32xf32> to vector<32x32xf32>
    %215 = arith.truncf %214 : vector<32x32xf32> to vector<32x32xbf16>
    %c0_109 = arith.constant 0 : index
    %c0_110 = arith.constant 0 : index
    %216 = vector.load %arg28[%c0_109, %c0_110] : memref<96x32xbf16, #tpu.memory_space<vmem>>, vector<32x32xbf16>
    %cst_111 = arith.constant dense<0.000000e+00> : vector<32x32xf32>
    %217 = tpu.matmul %215, %216, %cst_111 {dimension_numbers = #tpu.dot_dimension_numbers<[1], [0], [0], [1], [0, 0, 1, 1], [], []>} : vector<32x32xbf16>, vector<32x32xbf16>, vector<32x32xf32> -> vector<32x32xf32>
    %218 = vector.broadcast %213 : vector<1x32xf32> to vector<32x32xf32>
    %219 = arith.addf %218, %217 : vector<32x32xf32>
    %220 = vector.shape_cast %207 : vector<2x16x32xf32> to vector<32x32xf32>
    %221 = arith.truncf %220 : vector<32x32xf32> to vector<32x32xbf16>
    %c32_112 = arith.constant 32 : index
    %c0_113 = arith.constant 0 : index
    %222 = vector.load %arg28[%c32_112, %c0_113] : memref<96x32xbf16, #tpu.memory_space<vmem>>, vector<32x32xbf16>
    %cst_114 = arith.constant dense<0.000000e+00> : vector<32x32xf32>
    %223 = tpu.matmul %221, %222, %cst_114 {dimension_numbers = #tpu.dot_dimension_numbers<[1], [0], [0], [1], [0, 0, 1, 1], [], []>} : vector<32x32xbf16>, vector<32x32xbf16>, vector<32x32xf32> -> vector<32x32xf32>
    %224 = arith.addf %219, %223 : vector<32x32xf32>
    %225 = vector.shape_cast %212 : vector<2x16x32xf32> to vector<32x32xf32>
    %226 = arith.truncf %225 : vector<32x32xf32> to vector<32x32xbf16>
    %c64 = arith.constant 64 : index
    %c0_115 = arith.constant 0 : index
    %227 = vector.load %arg28[%c64, %c0_115] : memref<96x32xbf16, #tpu.memory_space<vmem>>, vector<32x32xbf16>
    %cst_116 = arith.constant dense<0.000000e+00> : vector<32x32xf32>
    %228 = tpu.matmul %226, %227, %cst_116 {dimension_numbers = #tpu.dot_dimension_numbers<[1], [0], [0], [1], [0, 0, 1, 1], [], []>} : vector<32x32xbf16>, vector<32x32xbf16>, vector<32x32xf32> -> vector<32x32xf32>
    %229 = arith.addf %224, %228 : vector<32x32xf32>
    %230 = vector.shape_cast %229 : vector<32x32xf32> to vector<2x16x32xf32>
    %231 = math.tanh %230 : vector<2x16x32xf32>
    %cst_117 = arith.constant 0.000000e+00 : f32
    %232 = vector.broadcast %cst_117 : f32 to vector<2x1x32xf32>
    %233 = vector.extract_strided_slice %231 {offsets = [0, 0, 0], sizes = [2, 15, 32], strides = [1, 1, 1]} : vector<2x16x32xf32> to vector<2x15x32xf32>
    %234 = tpu.concatenate %232, %233 in 1 : vector<2x1x32xf32>, vector<2x15x32xf32> -> vector<2x16x32xf32>
    %235 = vector.extract_strided_slice %231 {offsets = [0, 1, 0], sizes = [2, 15, 32], strides = [1, 1, 1]} : vector<2x16x32xf32> to vector<2x15x32xf32>
    %236 = tpu.concatenate %235, %232 in 1 : vector<2x15x32xf32>, vector<2x1x32xf32> -> vector<2x16x32xf32>
    %c0_118 = arith.constant 0 : index
    %c0_119 = arith.constant 0 : index
    %237 = vector.load %arg31[%c0_118, %c0_119] : memref<1x16xf32, #tpu.memory_space<vmem>>, vector<1x16xf32>
    %238 = vector.shape_cast %234 : vector<2x16x32xf32> to vector<32x32xf32>
    %239 = arith.truncf %238 : vector<32x32xf32> to vector<32x32xbf16>
    %c0_120 = arith.constant 0 : index
    %c0_121 = arith.constant 0 : index
    %240 = vector.load %arg30[%c0_120, %c0_121] : memref<96x16xbf16, #tpu.memory_space<vmem>>, vector<32x16xbf16>
    %cst_122 = arith.constant dense<0.000000e+00> : vector<32x16xf32>
    %241 = tpu.matmul %239, %240, %cst_122 {dimension_numbers = #tpu.dot_dimension_numbers<[1], [0], [0], [1], [0, 0, 1, 1], [], []>} : vector<32x32xbf16>, vector<32x16xbf16>, vector<32x16xf32> -> vector<32x16xf32>
    %242 = vector.broadcast %237 : vector<1x16xf32> to vector<32x16xf32>
    %243 = arith.addf %242, %241 : vector<32x16xf32>
    %244 = vector.shape_cast %231 : vector<2x16x32xf32> to vector<32x32xf32>
    %245 = arith.truncf %244 : vector<32x32xf32> to vector<32x32xbf16>
    %c32_123 = arith.constant 32 : index
    %c0_124 = arith.constant 0 : index
    %246 = vector.load %arg30[%c32_123, %c0_124] : memref<96x16xbf16, #tpu.memory_space<vmem>>, vector<32x16xbf16>
    %cst_125 = arith.constant dense<0.000000e+00> : vector<32x16xf32>
    %247 = tpu.matmul %245, %246, %cst_125 {dimension_numbers = #tpu.dot_dimension_numbers<[1], [0], [0], [1], [0, 0, 1, 1], [], []>} : vector<32x32xbf16>, vector<32x16xbf16>, vector<32x16xf32> -> vector<32x16xf32>
    %248 = arith.addf %243, %247 : vector<32x16xf32>
    %249 = vector.shape_cast %236 : vector<2x16x32xf32> to vector<32x32xf32>
    %250 = arith.truncf %249 : vector<32x32xf32> to vector<32x32xbf16>
    %c64_126 = arith.constant 64 : index
    %c0_127 = arith.constant 0 : index
    %251 = vector.load %arg30[%c64_126, %c0_127] : memref<96x16xbf16, #tpu.memory_space<vmem>>, vector<32x16xbf16>
    %cst_128 = arith.constant dense<0.000000e+00> : vector<32x16xf32>
    %252 = tpu.matmul %250, %251, %cst_128 {dimension_numbers = #tpu.dot_dimension_numbers<[1], [0], [0], [1], [0, 0, 1, 1], [], []>} : vector<32x32xbf16>, vector<32x16xbf16>, vector<32x16xf32> -> vector<32x16xf32>
    %253 = arith.addf %248, %252 : vector<32x16xf32>
    %254 = vector.shape_cast %253 : vector<32x16xf32> to vector<2x16x16xf32>
    %255 = vector.broadcast %151 : vector<2x16x1xf32> to vector<2x16x16xf32>
    %256 = arith.mulf %254, %255 : vector<2x16x16xf32>
    %c0_129 = arith.constant 0 : index
    %c0_130 = arith.constant 0 : index
    %c0_131 = arith.constant 0 : index
    %257 = vector.load %arg32[%c0_129, %c0_130, %c0_131] : memref<2x16x128xf32, #tpu.memory_space<vmem>>, vector<2x16x16xf32>
    tpu.vector_store %arg32[%c0_129, %c0_130, %c0_131], %256 {strides = array<i32>} : memref<2x16x128xf32, #tpu.memory_space<vmem>>, vector<2x16x16xf32>,
    %c0_132 = arith.constant 0 : index
    %c0_133 = arith.constant 0 : index
    %c16_134 = arith.constant 16 : index
    %258 = vector.load %arg32[%c0_132, %c0_133, %c16_134] : memref<2x16x128xf32, #tpu.memory_space<vmem>>, vector<2x16x16xf32>
    tpu.vector_store %arg32[%c0_132, %c0_133, %c16_134], %179 {strides = array<i32>} : memref<2x16x128xf32, #tpu.memory_space<vmem>>, vector<2x16x16xf32>,
    %c0_135 = arith.constant 0 : index
    %c0_136 = arith.constant 0 : index
    %c32_137 = arith.constant 32 : index
    %259 = vector.load %arg32[%c0_135, %c0_136, %c32_137] : memref<2x16x128xf32, #tpu.memory_space<vmem>>, vector<2x16x16xf32>
    tpu.vector_store %arg32[%c0_135, %c0_136, %c32_137], %172 {strides = array<i32>} : memref<2x16x128xf32, #tpu.memory_space<vmem>>, vector<2x16x16xf32>,
    %c0_138 = arith.constant 0 : index
    %c0_139 = arith.constant 0 : index
    %c48 = arith.constant 48 : index
    %260 = vector.load %arg32[%c0_138, %c0_139, %c48] : memref<2x16x128xf32, #tpu.memory_space<vmem>>, vector<2x16x8xf32>
    tpu.vector_store %arg32[%c0_138, %c0_139, %c48], %146 {strides = array<i32>} : memref<2x16x128xf32, #tpu.memory_space<vmem>>, vector<2x16x8xf32>,
    %c0_140 = arith.constant 0 : index
    %c0_141 = arith.constant 0 : index
    %c56 = arith.constant 56 : index
    %261 = vector.load %arg32[%c0_140, %c0_141, %c56] : memref<2x16x128xf32, #tpu.memory_space<vmem>>, vector<2x16x8xf32>
    tpu.vector_store %arg32[%c0_140, %c0_141, %c56], %150 {strides = array<i32>} : memref<2x16x128xf32, #tpu.memory_space<vmem>>, vector<2x16x8xf32>,
    %c0_142 = arith.constant 0 : index
    %c0_143 = arith.constant 0 : index
    %c64_144 = arith.constant 64 : index
    %262 = vector.load %arg32[%c0_142, %c0_143, %c64_144] : memref<2x16x128xf32, #tpu.memory_space<vmem>>, vector<2x16x8xf32>
    tpu.vector_store %arg32[%c0_142, %c0_143, %c64_144], %168 {strides = array<i32>} : memref<2x16x128xf32, #tpu.memory_space<vmem>>, vector<2x16x8xf32>,
    %cst_145 = arith.constant 0.000000e+00 : f32
    %263 = vector.broadcast %cst_145 : f32 to vector<2x16x56xf32>
    %c0_146 = arith.constant 0 : index
    %c0_147 = arith.constant 0 : index
    %c72 = arith.constant 72 : index
    %264 = vector.load %arg32[%c0_146, %c0_147, %c72] : memref<2x16x128xf32, #tpu.memory_space<vmem>>, vector<2x16x56xf32>
    tpu.vector_store %arg32[%c0_146, %c0_147, %c72], %263 {strides = array<i32>} : memref<2x16x128xf32, #tpu.memory_space<vmem>>, vector<2x16x56xf32>,
    %c0_148 = arith.constant 0 : index
    %c0_149 = arith.constant 0 : index
    %265 = vector.load %arg33[%c0_148, %c0_149] : memref<2x128xf32, #tpu.memory_space<vmem>>, vector<2x8xf32>
    tpu.vector_store %arg33[%c0_148, %c0_149], %86 {strides = array<i32>} : memref<2x128xf32, #tpu.memory_space<vmem>>, vector<2x8xf32>,
    %c0_150 = arith.constant 0 : index
    %c8 = arith.constant 8 : index
    %266 = vector.load %arg33[%c0_150, %c8] : memref<2x128xf32, #tpu.memory_space<vmem>>, vector<2x8xf32>
    tpu.vector_store %arg33[%c0_150, %c8], %169 {strides = array<i32>} : memref<2x128xf32, #tpu.memory_space<vmem>>, vector<2x8xf32>,
    %cst_151 = arith.constant 0.000000e+00 : f32
    %267 = vector.broadcast %cst_151 : f32 to vector<2x112xf32>
    %c0_152 = arith.constant 0 : index
    %c16_153 = arith.constant 16 : index
    %268 = vector.load %arg33[%c0_152, %c16_153] : memref<2x128xf32, #tpu.memory_space<vmem>>, vector<2x112xf32>
    tpu.vector_store %arg33[%c0_152, %c16_153], %267 {strides = array<i32>} : memref<2x128xf32, #tpu.memory_space<vmem>>, vector<2x112xf32>,
    return
  }
}

</mosaic_0001>

<llo_original>
// kernel: matcha_forward.1
$region0: #{matcha_forward.1}
  #allocation0 [shape = 'u32[]', space=smem, size = 0x4, offset = 0x4, fixed_abs, tag = 'smem constant byte address 0x4 - core index']
  #allocation1 [shape = 'u32[144,128]{1,0:T(1,128)}', space=vmem, size = 0x12000, scoped, tag = 'internal scratch']
  #allocation2 [shape = 'f32[1,1]{1,0:T(1,128)S(1)}', space=vmem, size = 0x200, scoped, tag = 'scoped memory for matcha_forward.1']
  %s0 = inlined_call_operand.smem [shape: u32[34], index: -1, kind: input, shape index: {}]
  %s1 = sld [smem:[%s0]]
  %s2 = scalar_lea.smem %s0, 1
  %s3 = sld [smem:[%s2]]
  %s4 = scalar_lea.smem %s0, 2
  %s5 = sld [smem:[%s4]]
  %s6 = scalar_lea.smem %s0, 3
  %s7 = sld [smem:[%s6]]
  %s8 = scalar_lea.smem %s0, 4
  %s9 = sld [smem:[%s8]]
  %s10 = scalar_lea.smem %s0, 5
  %s11 = sld [smem:[%s10]]
  %s12 = scalar_lea.smem %s0, 6
  %s13 = sld [smem:[%s12]]
  %s14 = scalar_lea.smem %s0, 7
  %s15 = sld [smem:[%s14]]
  %s16 = scalar_lea.smem %s0, 8
  %s17 = sld [smem:[%s16]]
  %s18 = scalar_lea.smem %s0, 9
  %s19 = sld [smem:[%s18]]
  %s20 = scalar_lea.smem %s0, 10
  %s21 = sld [smem:[%s20]]
  %s22 = scalar_lea.smem %s0, 11
  %s23 = sld [smem:[%s22]]
  %s24 = scalar_lea.smem %s0, 12
  %s25 = sld [smem:[%s24]]
  %s26 = scalar_lea.smem %s0, 13
  %s27 = sld [smem:[%s26]]
  %s28 = scalar_lea.smem %s0, 14
  %s29 = sld [smem:[%s28]]
  %s30 = scalar_lea.smem %s0, 15
  %s31 = sld [smem:[%s30]]
  %s32 = scalar_lea.smem %s0, 16
  %s33 = sld [smem:[%s32]]
  %s34 = scalar_lea.smem %s0, 17
  %s35 = sld [smem:[%s34]]
  %s36 = scalar_lea.smem %s0, 18
  %s37 = sld [smem:[%s36]]
  %s38 = scalar_lea.smem %s0, 19
  %s39 = sld [smem:[%s38]]
  %s40 = scalar_lea.smem %s0, 20
  %s41 = sld [smem:[%s40]]
  %s42 = scalar_lea.smem %s0, 21
  %s43 = sld [smem:[%s42]]
  %s44 = scalar_lea.smem %s0, 22
  %s45 = sld [smem:[%s44]]
  %s46 = scalar_lea.smem %s0, 23
  %s47 = sld [smem:[%s46]]
  %s48 = scalar_lea.smem %s0, 24
  %s49 = sld [smem:[%s48]]
  %s50 = scalar_lea.smem %s0, 25
  %s51 = sld [smem:[%s50]]
  %s52 = scalar_lea.smem %s0, 26
  %s53 = sld [smem:[%s52]]
  %s54 = scalar_lea.smem %s0, 27
  %s55 = sld [smem:[%s54]]
  %s56 = scalar_lea.smem %s0, 28
  %s57 = sld [smem:[%s56]]
  %s58 = scalar_lea.smem %s0, 29
  %s59 = sld [smem:[%s58]]
  %s60 = scalar_lea.smem %s0, 30
  %s61 = sld [smem:[%s60]]
  %s62 = scalar_lea.smem %s0, 31
  %s63 = sld [smem:[%s62]]
  %s64 = scalar_lea.smem %s0, 32
  %s65 = sld [smem:[%s64]]
  %s66 = scalar_lea.smem %s0, 33
  %s67 = sld [smem:[%s66]]
  %68 = xla_tuple %s65, %s67
  %s69 = sld [smem:[#allocation0]]
  $region146: #{matcha_forward.1} parent=0
    _
  %s71 = ssub.s32 1, %s69
  %s72 = scalar_select 0, %s71, %s69
  %v73 = vstv %s37
  %74 = vst [vmem:[#allocation2] sm:$0x1] %v73
  // Predicated region
  $region2: #{matcha_forward.1} parent=0 // pred_check
    _
  $region3: #{matcha_forward.1} parent=0 // pred_check_branch
    %76 = sbr.rel (0) target = $region5
  $region4: #{matcha_forward.1} parent=0 // pred_region
    _
  $region5: #{matcha_forward.1} parent=0 // pred_fallthru
    _
  // Predicated region
  $region6: #{matcha_forward.1} parent=0 // pred_check
    _
  $region7: #{matcha_forward.1} parent=0 // pred_check_branch
    %78 = sbr.rel (0) target = $region9
  $region8: #{matcha_forward.1} parent=0 // pred_region
    _
  $region9: #{matcha_forward.1} parent=0 // pred_fallthru
    _
  // Predicated region
  $region10: #{matcha_forward.1} parent=0 // pred_check
    _
  $region11: #{matcha_forward.1} parent=0 // pred_check_branch
    %80 = sbr.rel (0) target = $region13
  $region12: #{matcha_forward.1} parent=0 // pred_region
    _
  $region13: #{matcha_forward.1} parent=0 // pred_fallthru
    _
  // Predicated region
  $region14: #{matcha_forward.1} parent=0 // pred_check
    _
  $region15: #{matcha_forward.1} parent=0 // pred_check_branch
    %82 = sbr.rel (0) target = $region17
  $region16: #{matcha_forward.1} parent=0 // pred_region
    _
  $region17: #{matcha_forward.1} parent=0 // pred_fallthru
    _
  // Predicated region
  $region18: #{matcha_forward.1} parent=0 // pred_check
    _
  $region19: #{matcha_forward.1} parent=0 // pred_check_branch
    %84 = sbr.rel (0) target = $region21
  $region20: #{matcha_forward.1} parent=0 // pred_region
    _
  $region21: #{matcha_forward.1} parent=0 // pred_fallthru
    _
  // Predicated region
  $region22: #{matcha_forward.1} parent=0 // pred_check
    _
  $region23: #{matcha_forward.1} parent=0 // pred_check_branch
    %86 = sbr.rel (0) target = $region25
  $region24: #{matcha_forward.1} parent=0 // pred_region
    _
  $region25: #{matcha_forward.1} parent=0 // pred_fallthru
    _
  // Predicated region
  $region26: #{matcha_forward.1} parent=0 // pred_check
    _
  $region27: #{matcha_forward.1} parent=0 // pred_check_branch
    %88 = sbr.rel (0) target = $region29
  $region28: #{matcha_forward.1} parent=0 // pred_region
    _
  $region29: #{matcha_forward.1} parent=0 // pred_fallthru
    _
  // Predicated region
  $region30: #{matcha_forward.1} parent=0 // pred_check
    _
  $region31: #{matcha_forward.1} parent=0 // pred_check_branch
    %90 = sbr.rel (0) target = $region33
  $region32: #{matcha_forward.1} parent=0 // pred_region
    _
  $region33: #{matcha_forward.1} parent=0 // pred_fallthru
    _
  // Predicated region
  $region34: #{matcha_forward.1} parent=0 // pred_check
    _
  $region35: #{matcha_forward.1} parent=0 // pred_check_branch
    %92 = sbr.rel (0) target = $region37
  $region36: #{matcha_forward.1} parent=0 // pred_region
    _
  $region37: #{matcha_forward.1} parent=0 // pred_fallthru
    _
  // Predicated region
  $region38: #{matcha_forward.1} parent=0 // pred_check
    _
  $region39: #{matcha_forward.1} parent=0 // pred_check_branch
    %94 = sbr.rel (0) target = $region41
  $region40: #{matcha_forward.1} parent=0 // pred_region
    _
  $region41: #{matcha_forward.1} parent=0 // pred_fallthru
    _
  // Predicated region
  $region42: #{matcha_forward.1} parent=0 // pred_check
    _
  $region43: #{matcha_forward.1} parent=0 // pred_check_branch
    %96 = sbr.rel (0) target = $region45
  $region44: #{matcha_forward.1} parent=0 // pred_region
    _
  $region45: #{matcha_forward.1} parent=0 // pred_fallthru
    _
  // Predicated region
  $region46: #{matcha_forward.1} parent=0 // pred_check
    _
  $region47: #{matcha_forward.1} parent=0 // pred_check_branch
    %98 = sbr.rel (0) target = $region49
  $region48: #{matcha_forward.1} parent=0 // pred_region
    _
  $region49: #{matcha_forward.1} parent=0 // pred_fallthru
    _
  // Predicated region
  $region50: #{matcha_forward.1} parent=0 // pred_check
    _
  $region51: #{matcha_forward.1} parent=0 // pred_check_branch
    %100 = sbr.rel (0) target = $region53
  $region52: #{matcha_forward.1} parent=0 // pred_region
    _
  $region53: #{matcha_forward.1} parent=0 // pred_fallthru
    _
  // Predicated region
  $region54: #{matcha_forward.1} parent=0 // pred_check
    _
  $region55: #{matcha_forward.1} parent=0 // pred_check_branch
    %102 = sbr.rel (0) target = $region57
  $region56: #{matcha_forward.1} parent=0 // pred_region
    _
  $region57: #{matcha_forward.1} parent=0 // pred_fallthru
    _
  // Predicated region
  $region58: #{matcha_forward.1} parent=0 // pred_check
    _
  $region59: #{matcha_forward.1} parent=0 // pred_check_branch
    %104 = sbr.rel (0) target = $region61
  $region60: #{matcha_forward.1} parent=0 // pred_region
    _
  $region61: #{matcha_forward.1} parent=0 // pred_fallthru
    _
  // Predicated region
  $region62: #{matcha_forward.1} parent=0 // pred_check
    _
  $region63: #{matcha_forward.1} parent=0 // pred_check_branch
    %106 = sbr.rel (0) target = $region65
  $region64: #{matcha_forward.1} parent=0 // pred_region
    _
  $region65: #{matcha_forward.1} parent=0 // pred_fallthru
    _
  // Predicated region
  $region66: #{matcha_forward.1} parent=0 // pred_check
    _
  $region67: #{matcha_forward.1} parent=0 // pred_check_branch
    %108 = sbr.rel (0) target = $region69
  $region68: #{matcha_forward.1} parent=0 // pred_region
    _
  $region69: #{matcha_forward.1} parent=0 // pred_fallthru
    _
  // Predicated region
  $region70: #{matcha_forward.1} parent=0 // pred_check
    _
  $region71: #{matcha_forward.1} parent=0 // pred_check_branch
    %110 = sbr.rel (0) target = $region73
  $region72: #{matcha_forward.1} parent=0 // pred_region
    _
  $region73: #{matcha_forward.1} parent=0 // pred_fallthru
    _
  // Predicated region
  $region74: #{matcha_forward.1} parent=0 // pred_check
    _
  $region75: #{matcha_forward.1} parent=0 // pred_check_branch
    %112 = sbr.rel (0) target = $region77
  $region76: #{matcha_forward.1} parent=0 // pred_region
    _
  $region77: #{matcha_forward.1} parent=0 // pred_fallthru
    _
  // Predicated region
  $region78: #{matcha_forward.1} parent=0 // pred_check
    _
  $region79: #{matcha_forward.1} parent=0 // pred_check_branch
    %114 = sbr.rel (0) target = $region81
  $region80: #{matcha_forward.1} parent=0 // pred_region
    _
  $region81: #{matcha_forward.1} parent=0 // pred_fallthru
    _
  // Predicated region
  $region82: #{matcha_forward.1} parent=0 // pred_check
    _
  $region83: #{matcha_forward.1} parent=0 // pred_check_branch
    %116 = sbr.rel (0) target = $region85
  $region84: #{matcha_forward.1} parent=0 // pred_region
    _
  $region85: #{matcha_forward.1} parent=0 // pred_fallthru
    _
  // Predicated region
  $region86: #{matcha_forward.1} parent=0 // pred_check
    _
  $region87: #{matcha_forward.1} parent=0 // pred_check_branch
    %118 = sbr.rel (0) target = $region89
  $region88: #{matcha_forward.1} parent=0 // pred_region
    _
  $region89: #{matcha_forward.1} parent=0 // pred_fallthru
    _
  // Predicated region
  $region90: #{matcha_forward.1} parent=0 // pred_check
    _
  $region91: #{matcha_forward.1} parent=0 // pred_check_branch
    %120 = sbr.rel (0) target = $region93
  $region92: #{matcha_forward.1} parent=0 // pred_region
    _
  $region93: #{matcha_forward.1} parent=0 // pred_fallthru
    _
  // Predicated region
  $region94: #{matcha_forward.1} parent=0 // pred_check
    _
  $region95: #{matcha_forward.1} parent=0 // pred_check_branch
    %122 = sbr.rel (0) target = $region97
  $region96: #{matcha_forward.1} parent=0 // pred_region
    _
  $region97: #{matcha_forward.1} parent=0 // pred_fallthru
    _
  // Predicated region
  $region98: #{matcha_forward.1} parent=0 // pred_check
    _
  $region99: #{matcha_forward.1} parent=0 // pred_check_branch
    %124 = sbr.rel (0) target = $region101
  $region100: #{matcha_forward.1} parent=0 // pred_region
    _
  $region101: #{matcha_forward.1} parent=0 // pred_fallthru
    _
  // Predicated region
  $region102: #{matcha_forward.1} parent=0 // pred_check
    _
  $region103: #{matcha_forward.1} parent=0 // pred_check_branch
    %126 = sbr.rel (0) target = $region105
  $region104: #{matcha_forward.1} parent=0 // pred_region
    _
  $region105: #{matcha_forward.1} parent=0 // pred_fallthru
    _
  // Predicated region
  $region106: #{matcha_forward.1} parent=0 // pred_check
    _
  $region107: #{matcha_forward.1} parent=0 // pred_check_branch
    %128 = sbr.rel (0) target = $region109
  $region108: #{matcha_forward.1} parent=0 // pred_region
    _
  $region109: #{matcha_forward.1} parent=0 // pred_fallthru
    _
  // Predicated region
  $region110: #{matcha_forward.1} parent=0 // pred_check
    _
  $region111: #{matcha_forward.1} parent=0 // pred_check_branch
    %130 = sbr.rel (0) target = $region113
  $region112: #{matcha_forward.1} parent=0 // pred_region
    _
  $region113: #{matcha_forward.1} parent=0 // pred_fallthru
    _
  // Predicated region
  $region114: #{matcha_forward.1} parent=0 // pred_check
    _
  $region115: #{matcha_forward.1} parent=0 // pred_check_branch
    %132 = sbr.rel (0) target = $region117
  $region116: #{matcha_forward.1} parent=0 // pred_region
    _
  $region117: #{matcha_forward.1} parent=0 // pred_fallthru
    _
  // Predicated region
  $region118: #{matcha_forward.1} parent=0 // pred_check
    _
  $region119: #{matcha_forward.1} parent=0 // pred_check_branch
    %134 = sbr.rel (0) target = $region121
  $region120: #{matcha_forward.1} parent=0 // pred_region
    _
  $region121: #{matcha_forward.1} parent=0 // pred_fallthru
    _
  // Predicated region
  $region122: #{matcha_forward.1} parent=0 // pred_check
    _
  $region123: #{matcha_forward.1} parent=0 // pred_check_branch
    %136 = sbr.rel (0) target = $region125
  $region124: #{matcha_forward.1} parent=0 // pred_region
    _
  $region125: #{matcha_forward.1} parent=0 // pred_fallthru
    _
  // Predicated region
  $region126: #{matcha_forward.1} parent=0 // pred_check
    _
  $region127: #{matcha_forward.1} parent=0 // pred_check_branch
    %138 = sbr.rel (0) target = $region129
  $region128: #{matcha_forward.1} parent=0 // pred_region
    _
  $region129: #{matcha_forward.1} parent=0 // pred_fallthru
    _
  %v140 = vld [vmem:[%s3] sm:$0xff]
  %v141 = vld [vmem:[%s3 + $0x8] sm:$0xff]
  %v142 = vld [vmem:[%s1] sm:$0xff]
  %v143 = vld [vmem:[%s1 + $0x8] sm:$0xff]
  %v144 = vpack.c.bf16 %v143, %v142
  %v145 = vld [vmem:[%s19] sm:$0xf]
  %v146 = vld [vmem:[%s19 + $0x4] sm:$0xf]
  %v147 = vld [vmem:[%s19 + $0x8] sm:$0xf]
  %v148 = vld [vmem:[%s19 + $0xc] sm:$0xf]
  %v149 = vld [vmem:[%s19 + $0x10] sm:$0xf]
  %v150 = vld [vmem:[%s19 + $0x14] sm:$0xf]
  %v151 = vld [vmem:[%s21] sm:$0x1]
  %v153 = vlaneseq
  %v154 = vshrl.u32 %v153, 7
  %v155 = vsub.s32 0, %v154
  %v156 = vrot.slane %v151, %v155
  %v164 = vunpack.c.l.b16 %v145
  %v165 = vunpack.c.l.b16 %v146
  %v166 = vunpack.c.l.b16 %v147
  %v167 = vunpack.c.l.b16 %v148
  %v168 = vunpack.c.l.b16 %v149
  %v169 = vunpack.c.l.b16 %v150
  %v170 = vpack.c.b16 %v165, %v164
  %v171 = vpack.c.b16 %v167, %v166
  %v172 = vpack.c.b16 %v169, %v168
  %vm176 = vcmask 392192
  %v178 = vsel %vm176, %v144, 0
  %180 = vmatprep.subr.bf16.mxu0 0
  %181 = vmatpush1.bf16.msra.mxu0 0
  %182 = vmatprep.subr.bf16.mxu0 0
  %183 = vmatpush1.bf16.msra.mxu0 0
  %184 = vmatprep.subr.bf16.mxu0 0
  %185 = vmatpush1.bf16.msra.mxu0 0
  %186 = vmatprep.subr.bf16.mxu0 0
  %187 = vmatpush1.bf16.msra.mxu0 0
  %188 = vmatprep.subr.bf16.mxu0 0
  %189 = vmatpush1.bf16.msra.mxu0 0
  %190 = vmatprep.subr.bf16.mxu0 0
  %191 = vmatpush1.bf16.msra.mxu0 %v172
  %192 = vmatprep.subr.bf16.mxu0 0
  %193 = vmatpush1.bf16.msra.mxu0 %v171
  %194 = vmatprep.subr.bf16.mxu0 0
  %195 = vmatpush1.bf16.msra.mxu0 %v170
  %196 = vmatprep.subr.bf16.mxu0 0
  %197 = vmatpush2.bf16.msra.mxu0 0
  %198 = vmatprep.subr.bf16.mxu0 0
  %199 = vmatpush2.bf16.msra.mxu0 0
  %200 = vmatprep.subr.bf16.mxu0 0
  %201 = vmatpush2.bf16.msra.mxu0 0
  %202 = vmatprep.subr.bf16.mxu0 0
  %203 = vmatpush2.bf16.msra.mxu0 0
  %204 = vmatprep.subr.bf16.mxu0 0
  %205 = vmatpush2.bf16.msra.mxu0 0
  %206 = vmatprep.subr.bf16.mxu0 0
  %207 = vmatpush2.bf16.msra.mxu0 0
  %208 = vmatprep.subr.bf16.mxu0 0
  %209 = vmatpush2.bf16.msra.mxu0 0
  %210 = vmatprep.subr.bf16.mxu0 0
  %211 = vmatpush2.bf16.msra.mxu0 0
  %212 = vmatprep.mubr.bf16.mxu0 0
  %213 = vmatmul.mubr.bf16.gmra.mxu0 %v178
  %v214 = vpop.f32.mrf.mxu0
  %v215 = vadd.f32 %v156, %v214
  %v216 = vpop.f32.mrf.mxu0
  %v217 = vpop.f32.mrf.mxu0
  %v218 = vadd.f32 %v156, %v217
  %v219 = vpop.f32.mrf.mxu0
  %220 = vdwg.mxu0
  %v221 = vmax.f32 %v215, 0.0
  %v222 = vmax.f32 %v218, 0.0
  %224 = vset.pattern.permute.xlu0 0
  %225 = vperm.xlu0 %224, %v140
  %v226 = vpop.permute.xlu0 %225
  %229 = vset.pattern.permute.xlu0 0
  %230 = vperm.xlu0 %229, %v141
  %v231 = vpop.permute.xlu0 %230
  %v233 = vmul.f32 %v221, %v226
  %v234 = vmul.f32 %v222, %v231
  %v235 = vpack.c.bf16 %v234, %v233
  %v236 = vld [vmem:[%s23] sm:$0xf]
  %v237 = vld [vmem:[%s23 + $0x4] sm:$0xf]
  %v238 = vld [vmem:[%s23 + $0x8] sm:$0xf]
  %v239 = vld [vmem:[%s23 + $0xc] sm:$0xf]
  %v240 = vld [vmem:[%s25] sm:$0x1]
  %v242 = vlaneseq
  %v243 = vshrl.u32 %v242, 7
  %v244 = vsub.s32 0, %v243
  %v245 = vrot.slane %v240, %v244
  %v251 = vunpack.c.l.b16 %v236
  %v252 = vunpack.c.l.b16 %v237
  %v253 = vunpack.c.l.b16 %v238
  %v254 = vunpack.c.l.b16 %v239
  %v255 = vpack.c.b16 %v252, %v251
  %v256 = vpack.c.b16 %v254, %v253
  %vm259 = vcmask 261120
  %v261 = vsel %vm259, %v235, 0
  %263 = vmatprep.subr.bf16.mxu0 0
  %264 = vmatpush1.bf16.msra.mxu0 0
  %265 = vmatprep.subr.bf16.mxu0 0
  %266 = vmatpush1.bf16.msra.mxu0 0
  %267 = vmatprep.subr.bf16.mxu0 0
  %268 = vmatpush1.bf16.msra.mxu0 0
  %269 = vmatprep.subr.bf16.mxu0 0
  %270 = vmatpush1.bf16.msra.mxu0 0
  %271 = vmatprep.subr.bf16.mxu0 0
  %272 = vmatpush1.bf16.msra.mxu0 0
  %273 = vmatprep.subr.bf16.mxu0 0
  %274 = vmatpush1.bf16.msra.mxu0 0
  %275 = vmatprep.subr.bf16.mxu0 0
  %276 = vmatpush1.bf16.msra.mxu0 %v256
  %277 = vmatprep.subr.bf16.mxu0 0
  %278 = vmatpush1.bf16.msra.mxu0 %v255
  %279 = vmatprep.subr.bf16.mxu0 0
  %280 = vmatpush2.bf16.msra.mxu0 0
  %281 = vmatprep.subr.bf16.mxu0 0
  %282 = vmatpush2.bf16.msra.mxu0 0
  %283 = vmatprep.subr.bf16.mxu0 0
  %284 = vmatpush2.bf16.msra.mxu0 0
  %285 = vmatprep.subr.bf16.mxu0 0
  %286 = vmatpush2.bf16.msra.mxu0 0
  %287 = vmatprep.subr.bf16.mxu0 0
  %288 = vmatpush2.bf16.msra.mxu0 0
  %289 = vmatprep.subr.bf16.mxu0 0
  %290 = vmatpush2.bf16.msra.mxu0 0
  %291 = vmatprep.subr.bf16.mxu0 0
  %292 = vmatpush2.bf16.msra.mxu0 0
  %293 = vmatprep.subr.bf16.mxu0 0
  %294 = vmatpush2.bf16.msra.mxu0 0
  %295 = vmatprep.mubr.bf16.mxu0 0
  %296 = vmatmul.mubr.bf16.gmra.mxu0 %v261
  %v297 = vpop.f32.mrf.mxu0
  %v298 = vadd.f32 %v245, %v297
  %v299 = vpop.f32.mrf.mxu0
  %v300 = vpop.f32.mrf.mxu0
  %v301 = vadd.f32 %v245, %v300
  %v302 = vpop.f32.mrf.mxu0
  %303 = vdwg.mxu0
  %v304 = vmul.f32 %v298, %v226
  %v305 = vmul.f32 %v301, %v231
  %v306 = vld [vmem:[%s5] sm:$0xff]
  %v307 = vld [vmem:[%s5 + $0x8] sm:$0xff]
  %309 = vset.pattern.permute.xlu0 0
  %310 = vperm.xlu0 %309, %v306
  %v311 = vpop.permute.xlu0 %310
  %314 = vset.pattern.permute.xlu0 0
  %315 = vperm.xlu0 %314, %v307
  %v316 = vpop.permute.xlu0 %315
  %v318 = vmul.f32 %v304, %v311
  %v319 = vmul.f32 %v305, %v316
  %v322 = vrot.slane %v318, 7
  %v323 = vrot.slane %v319, 7
  %vm326 = vcmask 1040384
  %v327 = vsel %vm326, 0.0, %v322
  %v328 = vsel %vm326, 0.0, %v323
  %v329 = vrot.slane %v318, 1
  %v330 = vrot.slane %v319, 1
  %vm333 = vcmask 1046528
  %v334 = vsel %vm333, %v329, 0.0
  %v335 = vsel %vm333, %v330, 0.0
  %v336 = vld [vmem:[%s29] sm:$0x1]
  %v337 = vpack.c.bf16 %v328, %v327
  %v338 = vld [vmem:[%s27] sm:$0xf]
  %v339 = vld [vmem:[%s27 + $0x4] sm:$0xf]
  %v342 = vunpack.c.l.b16 %v338
  %v343 = vunpack.c.l.b16 %v339
  %v344 = vpack.c.b16 %v343, %v342
  %vm346 = vcmask 130048
  %v348 = vsel %vm346, %v337, 0
  %350 = vmatprep.subr.bf16.mxu0 0
  %351 = vmatpush1.bf16.msra.mxu0 0
  %352 = vmatprep.subr.bf16.mxu0 0
  %353 = vmatpush1.bf16.msra.mxu0 0
  %354 = vmatprep.subr.bf16.mxu0 0
  %355 = vmatpush1.bf16.msra.mxu0 0
  %356 = vmatprep.subr.bf16.mxu0 0
  %357 = vmatpush1.bf16.msra.mxu0 0
  %358 = vmatprep.subr.bf16.mxu0 0
  %359 = vmatpush1.bf16.msra.mxu0 0
  %360 = vmatprep.subr.bf16.mxu0 0
  %361 = vmatpush1.bf16.msra.mxu0 0
  %362 = vmatprep.subr.bf16.mxu0 0
  %363 = vmatpush1.bf16.msra.mxu0 0
  %364 = vmatprep.subr.bf16.mxu0 0
  %365 = vmatpush1.bf16.msra.mxu0 %v344
  %366 = vmatprep.subr.bf16.mxu0 0
  %367 = vmatpush2.bf16.msra.mxu0 0
  %368 = vmatprep.subr.bf16.mxu0 0
  %369 = vmatpush2.bf16.msra.mxu0 0
  %370 = vmatprep.subr.bf16.mxu0 0
  %371 = vmatpush2.bf16.msra.mxu0 0
  %372 = vmatprep.subr.bf16.mxu0 0
  %373 = vmatpush2.bf16.msra.mxu0 0
  %374 = vmatprep.subr.bf16.mxu0 0
  %375 = vmatpush2.bf16.msra.mxu0 0
  %376 = vmatprep.subr.bf16.mxu0 0
  %377 = vmatpush2.bf16.msra.mxu0 0
  %378 = vmatprep.subr.bf16.mxu0 0
  %379 = vmatpush2.bf16.msra.mxu0 0
  %380 = vmatprep.subr.bf16.mxu0 0
  %381 = vmatpush2.bf16.msra.mxu0 0
  %382 = vmatprep.mubr.bf16.mxu0 0
  %383 = vmatmul.mubr.bf16.gmra.mxu0 %v348
  %v384 = vpop.f32.mrf.mxu0
  %v385 = vadd.f32 0.0, %v384
  %v386 = vpop.f32.mrf.mxu0
  %v387 = vpop.f32.mrf.mxu0
  %v388 = vadd.f32 0.0, %v387
  %v389 = vpop.f32.mrf.mxu0
  %390 = vdwg.mxu0
  %v392 = vlaneseq
  %v393 = vshrl.u32 %v392, 7
  %v394 = vsub.s32 0, %v393
  %v395 = vrot.slane %v336, %v394
  %v397 = vadd.f32 %v395, %v385
  %v398 = vadd.f32 %v395, %v388
  %v399 = vpack.c.bf16 %v319, %v318
  %v400 = vld [vmem:[%s27 + $0x8] sm:$0xf]
  %v401 = vld [vmem:[%s27 + $0xc] sm:$0xf]
  %v404 = vunpack.c.l.b16 %v400
  %v405 = vunpack.c.l.b16 %v401
  %v406 = vpack.c.b16 %v405, %v404
  %v409 = vsel %vm346, %v399, 0
  %411 = vmatprep.subr.bf16.mxu0 0
  %412 = vmatpush1.bf16.msra.mxu0 0
  %413 = vmatprep.subr.bf16.mxu0 0
  %414 = vmatpush1.bf16.msra.mxu0 0
  %415 = vmatprep.subr.bf16.mxu0 0
  %416 = vmatpush1.bf16.msra.mxu0 0
  %417 = vmatprep.subr.bf16.mxu0 0
  %418 = vmatpush1.bf16.msra.mxu0 0
  %419 = vmatprep.subr.bf16.mxu0 0
  %420 = vmatpush1.bf16.msra.mxu0 0
  %421 = vmatprep.subr.bf16.mxu0 0
  %422 = vmatpush1.bf16.msra.mxu0 0
  %423 = vmatprep.subr.bf16.mxu0 0
  %424 = vmatpush1.bf16.msra.mxu0 0
  %425 = vmatprep.subr.bf16.mxu0 0
  %426 = vmatpush1.bf16.msra.mxu0 %v406
  %427 = vmatprep.subr.bf16.mxu0 0
  %428 = vmatpush2.bf16.msra.mxu0 0
  %429 = vmatprep.subr.bf16.mxu0 0
  %430 = vmatpush2.bf16.msra.mxu0 0
  %431 = vmatprep.subr.bf16.mxu0 0
  %432 = vmatpush2.bf16.msra.mxu0 0
  %433 = vmatprep.subr.bf16.mxu0 0
  %434 = vmatpush2.bf16.msra.mxu0 0
  %435 = vmatprep.subr.bf16.mxu0 0
  %436 = vmatpush2.bf16.msra.mxu0 0
  %437 = vmatprep.subr.bf16.mxu0 0
  %438 = vmatpush2.bf16.msra.mxu0 0
  %439 = vmatprep.subr.bf16.mxu0 0
  %440 = vmatpush2.bf16.msra.mxu0 0
  %441 = vmatprep.subr.bf16.mxu0 0
  %442 = vmatpush2.bf16.msra.mxu0 0
  %443 = vmatprep.mubr.bf16.mxu0 0
  %444 = vmatmul.mubr.bf16.gmra.mxu0 %v409
  %v445 = vpop.f32.mrf.mxu0
  %v446 = vadd.f32 0.0, %v445
  %v447 = vpop.f32.mrf.mxu0
  %v448 = vpop.f32.mrf.mxu0
  %v449 = vadd.f32 0.0, %v448
  %v450 = vpop.f32.mrf.mxu0
  %451 = vdwg.mxu0
  %v452 = vadd.f32 %v397, %v446
  %v453 = vadd.f32 %v398, %v449
  %v454 = vpack.c.bf16 %v335, %v334
  %v455 = vld [vmem:[%s27 + $0x10] sm:$0xf]
  %v456 = vld [vmem:[%s27 + $0x14] sm:$0xf]
  %v459 = vunpack.c.l.b16 %v455
  %v460 = vunpack.c.l.b16 %v456
  %v461 = vpack.c.b16 %v460, %v459
  %v464 = vsel %vm346, %v454, 0
  %466 = vmatprep.subr.bf16.mxu0 0
  %467 = vmatpush1.bf16.msra.mxu0 0
  %468 = vmatprep.subr.bf16.mxu0 0
  %469 = vmatpush1.bf16.msra.mxu0 0
  %470 = vmatprep.subr.bf16.mxu0 0
  %471 = vmatpush1.bf16.msra.mxu0 0
  %472 = vmatprep.subr.bf16.mxu0 0
  %473 = vmatpush1.bf16.msra.mxu0 0
  %474 = vmatprep.subr.bf16.mxu0 0
  %475 = vmatpush1.bf16.msra.mxu0 0
  %476 = vmatprep.subr.bf16.mxu0 0
  %477 = vmatpush1.bf16.msra.mxu0 0
  %478 = vmatprep.subr.bf16.mxu0 0
  %479 = vmatpush1.bf16.msra.mxu0 0
  %480 = vmatprep.subr.bf16.mxu0 0
  %481 = vmatpush1.bf16.msra.mxu0 %v461
  %482 = vmatprep.subr.bf16.mxu0 0
  %483 = vmatpush2.bf16.msra.mxu0 0
  %484 = vmatprep.subr.bf16.mxu0 0
  %485 = vmatpush2.bf16.msra.mxu0 0
  %486 = vmatprep.subr.bf16.mxu0 0
  %487 = vmatpush2.bf16.msra.mxu0 0
  %488 = vmatprep.subr.bf16.mxu0 0
  %489 = vmatpush2.bf16.msra.mxu0 0
  %490 = vmatprep.subr.bf16.mxu0 0
  %491 = vmatpush2.bf16.msra.mxu0 0
  %492 = vmatprep.subr.bf16.mxu0 0
  %493 = vmatpush2.bf16.msra.mxu0 0
  %494 = vmatprep.subr.bf16.mxu0 0
  %495 = vmatpush2.bf16.msra.mxu0 0
  %496 = vmatprep.subr.bf16.mxu0 0
  %497 = vmatpush2.bf16.msra.mxu0 0
  %498 = vmatprep.mubr.bf16.mxu0 0
  %499 = vmatmul.mubr.bf16.gmra.mxu0 %v464
  %v500 = vpop.f32.mrf.mxu0
  %v501 = vadd.f32 0.0, %v500
  %v502 = vpop.f32.mrf.mxu0
  %v503 = vpop.f32.mrf.mxu0
  %v504 = vadd.f32 0.0, %v503
  %v505 = vpop.f32.mrf.mxu0
  %506 = vdwg.mxu0
  %v507 = vadd.f32 %v452, %v501
  %v508 = vadd.f32 %v453, %v504
  %v509 = vmax.f32 %v507, 0.0
  %v510 = vmax.f32 %v508, 0.0
  %v511 = vmul.f32 %v509, %v311
  %v512 = vmul.f32 %v510, %v316
  %v515 = vrot.slane %v511, 7
  %v516 = vrot.slane %v512, 7
  %v519 = vsel %vm326, 0.0, %v515
  %v520 = vsel %vm326, 0.0, %v516
  %v521 = vrot.slane %v511, 1
  %v522 = vrot.slane %v512, 1
  %v525 = vsel %vm333, %v521, 0.0
  %v526 = vsel %vm333, %v522, 0.0
  %v527 = vld [vmem:[%s33] sm:$0x1]
  %v528 = vpack.c.bf16 %v520, %v519
  %v529 = vld [vmem:[%s31] sm:$0xf]
  %v530 = vld [vmem:[%s31 + $0x4] sm:$0xf]
  %v533 = vunpack.c.l.b16 %v529
  %v534 = vunpack.c.l.b16 %v530
  %v535 = vpack.c.b16 %v534, %v533
  %v538 = vsel %vm346, %v528, 0
  %540 = vmatprep.subr.bf16.mxu0 0
  %541 = vmatpush1.bf16.msra.mxu0 0
  %542 = vmatprep.subr.bf16.mxu0 0
  %543 = vmatpush1.bf16.msra.mxu0 0
  %544 = vmatprep.subr.bf16.mxu0 0
  %545 = vmatpush1.bf16.msra.mxu0 0
  %546 = vmatprep.subr.bf16.mxu0 0
  %547 = vmatpush1.bf16.msra.mxu0 0
  %548 = vmatprep.subr.bf16.mxu0 0
  %549 = vmatpush1.bf16.msra.mxu0 0
  %550 = vmatprep.subr.bf16.mxu0 0
  %551 = vmatpush1.bf16.msra.mxu0 0
  %552 = vmatprep.subr.bf16.mxu0 0
  %553 = vmatpush1.bf16.msra.mxu0 0
  %554 = vmatprep.subr.bf16.mxu0 0
  %555 = vmatpush1.bf16.msra.mxu0 %v535
  %556 = vmatprep.subr.bf16.mxu0 0
  %557 = vmatpush2.bf16.msra.mxu0 0
  %558 = vmatprep.subr.bf16.mxu0 0
  %559 = vmatpush2.bf16.msra.mxu0 0
  %560 = vmatprep.subr.bf16.mxu0 0
  %561 = vmatpush2.bf16.msra.mxu0 0
  %562 = vmatprep.subr.bf16.mxu0 0
  %563 = vmatpush2.bf16.msra.mxu0 0
  %564 = vmatprep.subr.bf16.mxu0 0
  %565 = vmatpush2.bf16.msra.mxu0 0
  %566 = vmatprep.subr.bf16.mxu0 0
  %567 = vmatpush2.bf16.msra.mxu0 0
  %568 = vmatprep.subr.bf16.mxu0 0
  %569 = vmatpush2.bf16.msra.mxu0 0
  %570 = vmatprep.subr.bf16.mxu0 0
  %571 = vmatpush2.bf16.msra.mxu0 0
  %572 = vmatprep.mubr.bf16.mxu0 0
  %573 = vmatmul.mubr.bf16.gmra.mxu0 %v538
  %v574 = vpop.f32.mrf.mxu0
  %v575 = vadd.f32 0.0, %v574
  %v576 = vpop.f32.mrf.mxu0
  %v577 = vpop.f32.mrf.mxu0
  %v578 = vadd.f32 0.0, %v577
  %v579 = vpop.f32.mrf.mxu0
  %580 = vdwg.mxu0
  %v582 = vlaneseq
  %v583 = vshrl.u32 %v582, 7
  %v584 = vsub.s32 0, %v583
  %v585 = vrot.slane %v527, %v584
  %v587 = vadd.f32 %v585, %v575
  %v588 = vadd.f32 %v585, %v578
  %v589 = vpack.c.bf16 %v512, %v511
  %v590 = vld [vmem:[%s31 + $0x8] sm:$0xf]
  %v591 = vld [vmem:[%s31 + $0xc] sm:$0xf]
  %v594 = vunpack.c.l.b16 %v590
  %v595 = vunpack.c.l.b16 %v591
  %v596 = vpack.c.b16 %v595, %v594
  %v599 = vsel %vm346, %v589, 0
  %601 = vmatprep.subr.bf16.mxu0 0
  %602 = vmatpush1.bf16.msra.mxu0 0
  %603 = vmatprep.subr.bf16.mxu0 0
  %604 = vmatpush1.bf16.msra.mxu0 0
  %605 = vmatprep.subr.bf16.mxu0 0
  %606 = vmatpush1.bf16.msra.mxu0 0
  %607 = vmatprep.subr.bf16.mxu0 0
  %608 = vmatpush1.bf16.msra.mxu0 0
  %609 = vmatprep.subr.bf16.mxu0 0
  %610 = vmatpush1.bf16.msra.mxu0 0
  %611 = vmatprep.subr.bf16.mxu0 0
  %612 = vmatpush1.bf16.msra.mxu0 0
  %613 = vmatprep.subr.bf16.mxu0 0
  %614 = vmatpush1.bf16.msra.mxu0 0
  %615 = vmatprep.subr.bf16.mxu0 0
  %616 = vmatpush1.bf16.msra.mxu0 %v596
  %617 = vmatprep.subr.bf16.mxu0 0
  %618 = vmatpush2.bf16.msra.mxu0 0
  %619 = vmatprep.subr.bf16.mxu0 0
  %620 = vmatpush2.bf16.msra.mxu0 0
  %621 = vmatprep.subr.bf16.mxu0 0
  %622 = vmatpush2.bf16.msra.mxu0 0
  %623 = vmatprep.subr.bf16.mxu0 0
  %624 = vmatpush2.bf16.msra.mxu0 0
  %625 = vmatprep.subr.bf16.mxu0 0
  %626 = vmatpush2.bf16.msra.mxu0 0
  %627 = vmatprep.subr.bf16.mxu0 0
  %628 = vmatpush2.bf16.msra.mxu0 0
  %629 = vmatprep.subr.bf16.mxu0 0
  %630 = vmatpush2.bf16.msra.mxu0 0
  %631 = vmatprep.subr.bf16.mxu0 0
  %632 = vmatpush2.bf16.msra.mxu0 0
  %633 = vmatprep.mubr.bf16.mxu0 0
  %634 = vmatmul.mubr.bf16.gmra.mxu0 %v599
  %v635 = vpop.f32.mrf.mxu0
  %v636 = vadd.f32 0.0, %v635
  %v637 = vpop.f32.mrf.mxu0
  %v638 = vpop.f32.mrf.mxu0
  %v639 = vadd.f32 0.0, %v638
  %v640 = vpop.f32.mrf.mxu0
  %641 = vdwg.mxu0
  %v642 = vadd.f32 %v587, %v636
  %v643 = vadd.f32 %v588, %v639
  %v644 = vpack.c.bf16 %v526, %v525
  %v645 = vld [vmem:[%s31 + $0x10] sm:$0xf]
  %v646 = vld [vmem:[%s31 + $0x14] sm:$0xf]
  %v649 = vunpack.c.l.b16 %v645
  %v650 = vunpack.c.l.b16 %v646
  %v651 = vpack.c.b16 %v650, %v649
  %v654 = vsel %vm346, %v644, 0
  %656 = vmatprep.subr.bf16.mxu0 0
  %657 = vmatpush1.bf16.msra.mxu0 0
  %658 = vmatprep.subr.bf16.mxu0 0
  %659 = vmatpush1.bf16.msra.mxu0 0
  %660 = vmatprep.subr.bf16.mxu0 0
  %661 = vmatpush1.bf16.msra.mxu0 0
  %662 = vmatprep.subr.bf16.mxu0 0
  %663 = vmatpush1.bf16.msra.mxu0 0
  %664 = vmatprep.subr.bf16.mxu0 0
  %665 = vmatpush1.bf16.msra.mxu0 0
  %666 = vmatprep.subr.bf16.mxu0 0
  %667 = vmatpush1.bf16.msra.mxu0 0
  %668 = vmatprep.subr.bf16.mxu0 0
  %669 = vmatpush1.bf16.msra.mxu0 0
  %670 = vmatprep.subr.bf16.mxu0 0
  %671 = vmatpush1.bf16.msra.mxu0 %v651
  %672 = vmatprep.subr.bf16.mxu0 0
  %673 = vmatpush2.bf16.msra.mxu0 0
  %674 = vmatprep.subr.bf16.mxu0 0
  %675 = vmatpush2.bf16.msra.mxu0 0
  %676 = vmatprep.subr.bf16.mxu0 0
  %677 = vmatpush2.bf16.msra.mxu0 0
  %678 = vmatprep.subr.bf16.mxu0 0
  %679 = vmatpush2.bf16.msra.mxu0 0
  %680 = vmatprep.subr.bf16.mxu0 0
  %681 = vmatpush2.bf16.msra.mxu0 0
  %682 = vmatprep.subr.bf16.mxu0 0
  %683 = vmatpush2.bf16.msra.mxu0 0
  %684 = vmatprep.subr.bf16.mxu0 0
  %685 = vmatpush2.bf16.msra.mxu0 0
  %686 = vmatprep.subr.bf16.mxu0 0
  %687 = vmatpush2.bf16.msra.mxu0 0
  %688 = vmatprep.mubr.bf16.mxu0 0
  %689 = vmatmul.mubr.bf16.gmra.mxu0 %v654
  %v690 = vpop.f32.mrf.mxu0
  %v691 = vadd.f32 0.0, %v690
  %v692 = vpop.f32.mrf.mxu0
  %v693 = vpop.f32.mrf.mxu0
  %v694 = vadd.f32 0.0, %v693
  %v695 = vpop.f32.mrf.mxu0
  %696 = vdwg.mxu0
  %v697 = vadd.f32 %v642, %v691
  %v698 = vadd.f32 %v643, %v694
  %v699 = vmax.f32 %v697, 0.0
  %v700 = vmax.f32 %v698, 0.0
  %v701 = vmul.f32 %v699, %v311
  %v702 = vmul.f32 %v700, %v316
  %v703 = vld [vmem:[%s35] sm:$0x1]
  %v705 = vlaneseq
  %v706 = vshrl.u32 %v705, 7
  %v707 = vsub.s32 0, %v706
  %v708 = vrot.slane %v703, %v707
  %v710 = vmul.f32 %v701, %v708
  %v711 = vmul.f32 %v702, %v708
  %v712 = vsel %vm346, %v710, 0.0
  %713 = vadd.xlane.f32.xlu0 %v712
  %v714 = vpop.xlane.xlu0 %713
  %v715 = vsel %vm346, %v711, 0.0
  %716 = vadd.xlane.f32.xlu0 %v715
  %v717 = vpop.xlane.xlu0 %716
  %v718 = vld [vmem:[#allocation2] sm:$0x1]
  %v720 = vlaneseq
  %v721 = vshrl.u32 %v720, 7
  %v722 = vsub.s32 0, %v721
  %v723 = vrot.slane %v718, %v722
  %724 = vset.pattern.permute.xlu0 0
  %725 = vperm.xlu0 %724, %v723
  %v726 = vpop.permute.xlu0 %725
  %v728 = vadd.f32 %v714, %v726
  %v729 = vadd.f32 %v717, %v726
  %v730 = vmul.f32 %v728, %v306
  %v731 = vmul.f32 %v729, %v307
  %v732 = vld [vmem:[%s15] sm:$0x3]
  %v733 = vpack.c.bf16 %v732, %v732
  %v734 = vld [vmem:[%s47] sm:$0xf]
  %v735 = vld [vmem:[%s47 + $0x4] sm:$0xf]
  %v736 = vld [vmem:[%s49] sm:$0x1]
  %v738 = vlaneseq
  %v739 = vshrl.u32 %v738, 7
  %v740 = vsub.s32 0, %v739
  %v741 = vrot.slane %v736, %v740
  %v745 = vunpack.c.l.b16 %v734
  %v746 = vunpack.c.l.b16 %v735
  %v747 = vpack.c.b16 %v746, %v745
  %v750 = vsel %vm346, %v733, 0
  %752 = vmatprep.subr.bf16.mxu0 0
  %753 = vmatpush1.bf16.msra.mxu0 0
  %754 = vmatprep.subr.bf16.mxu0 0
  %755 = vmatpush1.bf16.msra.mxu0 0
  %756 = vmatprep.subr.bf16.mxu0 0
  %757 = vmatpush1.bf16.msra.mxu0 0
  %758 = vmatprep.subr.bf16.mxu0 0
  %759 = vmatpush1.bf16.msra.mxu0 0
  %760 = vmatprep.subr.bf16.mxu0 0
  %761 = vmatpush1.bf16.msra.mxu0 0
  %762 = vmatprep.subr.bf16.mxu0 0
  %763 = vmatpush1.bf16.msra.mxu0 0
  %764 = vmatprep.subr.bf16.mxu0 0
  %765 = vmatpush1.bf16.msra.mxu0 0
  %766 = vmatprep.subr.bf16.mxu0 0
  %767 = vmatpush1.bf16.msra.mxu0 %v747
  %768 = vmatprep.subr.bf16.mxu0 0
  %769 = vmatpush2.bf16.msra.mxu0 0
  %770 = vmatprep.subr.bf16.mxu0 0
  %771 = vmatpush2.bf16.msra.mxu0 0
  %772 = vmatprep.subr.bf16.mxu0 0
  %773 = vmatpush2.bf16.msra.mxu0 0
  %774 = vmatprep.subr.bf16.mxu0 0
  %775 = vmatpush2.bf16.msra.mxu0 0
  %776 = vmatprep.subr.bf16.mxu0 0
  %777 = vmatpush2.bf16.msra.mxu0 0
  %778 = vmatprep.subr.bf16.mxu0 0
  %779 = vmatpush2.bf16.msra.mxu0 0
  %780 = vmatprep.subr.bf16.mxu0 0
  %781 = vmatpush2.bf16.msra.mxu0 0
  %782 = vmatprep.subr.bf16.mxu0 0
  %783 = vmatpush2.bf16.msra.mxu0 0
  %784 = vmatprep.mubr.bf16.mxu0 0
  %785 = vmatmul.mubr.bf16.gmra.mxu0 %v750
  %v786 = vpop.f32.mrf.mxu0
  %v787 = vadd.f32 %v741, %v786
  %v788 = vpop.f32.mrf.mxu0
  %v789 = vpop.f32.mrf.mxu0
  %v790 = vpop.f32.mrf.mxu0
  %791 = vdwg.mxu0
  %v794 = vunpack.c.l.s4 1966171168
  %v795 = vunpack.c.0.s8 %v794
  %v796 = vlaneseq
  %v797 = vshrl.u32 %v796, 7
  %v798 = vsub.s32 %v795, %v797
  %v799 = vrot.slane %v787, %v798
  %v800 = vcombine.high %v799, %v799
  %v802 = vunpack.c.l.s4 1966171168
  %v803 = vunpack.c.0.s8 %v802
  %v804 = vlaneseq
  %v805 = vshrl.u32 %v804, 7
  %v806 = vsub.s32 %v803, %v805
  %v807 = vrot.slane %v799, %v806
  %v809 = vunpack.c.l.s4 1966171168
  %v810 = vunpack.c.0.s8 %v809
  %v811 = vlaneseq
  %v812 = vshrl.u32 %v811, 7
  %v813 = vsub.s32 %v810, %v812
  %v814 = vrot.slane %v800, %v813
  %v815 = vld [vmem:[%s9] sm:$0xff]
  %v816 = vld [vmem:[%s9 + $0x8] sm:$0xff]
  %v817 = vld [vmem:[%s9 + $0x10] sm:$0xff]
  %v818 = vld [vmem:[%s9 + $0x18] sm:$0xff]
  %v819 = vpack.c.bf16 %v816, %v815
  %v820 = vpack.c.bf16 %v818, %v817
  %v821 = vld [vmem:[%s39] sm:$0xf]
  %v822 = vld [vmem:[%s39 + $0x4] sm:$0xf]
  %v823 = vld [vmem:[%s41] sm:$0x1]
  %v825 = vlaneseq
  %v826 = vshrl.u32 %v825, 7
  %v827 = vsub.s32 0, %v826
  %v828 = vrot.slane %v823, %v827
  %v832 = vunpack.c.l.b16 %v821
  %v833 = vunpack.c.l.b16 %v822
  %v834 = vpack.c.b16 %v833, %v832
  %v837 = vsel %vm346, %v819, 0
  %v840 = vsel %vm346, %v820, 0
  %842 = vmatprep.subr.bf16.mxu0 0
  %843 = vmatpush1.bf16.msra.mxu0 0
  %844 = vmatprep.subr.bf16.mxu0 0
  %845 = vmatpush1.bf16.msra.mxu0 0
  %846 = vmatprep.subr.bf16.mxu0 0
  %847 = vmatpush1.bf16.msra.mxu0 0
  %848 = vmatprep.subr.bf16.mxu0 0
  %849 = vmatpush1.bf16.msra.mxu0 0
  %850 = vmatprep.subr.bf16.mxu0 0
  %851 = vmatpush1.bf16.msra.mxu0 0
  %852 = vmatprep.subr.bf16.mxu0 0
  %853 = vmatpush1.bf16.msra.mxu0 0
  %854 = vmatprep.subr.bf16.mxu0 0
  %855 = vmatpush1.bf16.msra.mxu0 0
  %856 = vmatprep.subr.bf16.mxu0 0
  %857 = vmatpush1.bf16.msra.mxu0 %v834
  %858 = vmatprep.subr.bf16.mxu0 0
  %859 = vmatpush2.bf16.msra.mxu0 0
  %860 = vmatprep.subr.bf16.mxu0 0
  %861 = vmatpush2.bf16.msra.mxu0 0
  %862 = vmatprep.subr.bf16.mxu0 0
  %863 = vmatpush2.bf16.msra.mxu0 0
  %864 = vmatprep.subr.bf16.mxu0 0
  %865 = vmatpush2.bf16.msra.mxu0 0
  %866 = vmatprep.subr.bf16.mxu0 0
  %867 = vmatpush2.bf16.msra.mxu0 0
  %868 = vmatprep.subr.bf16.mxu0 0
  %869 = vmatpush2.bf16.msra.mxu0 0
  %870 = vmatprep.subr.bf16.mxu0 0
  %871 = vmatpush2.bf16.msra.mxu0 0
  %872 = vmatprep.subr.bf16.mxu0 0
  %873 = vmatpush2.bf16.msra.mxu0 0
  %874 = vmatprep.mubr.bf16.mxu0 0
  %875 = vmatmul.mubr.bf16.gmra.mxu0 %v837
  %v876 = vpop.f32.mrf.mxu0
  %v877 = vadd.f32 %v828, %v876
  %v878 = vpop.f32.mrf.mxu0
  %v879 = vpop.f32.mrf.mxu0
  %v880 = vadd.f32 %v828, %v879
  %v881 = vpop.f32.mrf.mxu0
  %882 = vmatprep.mubr.bf16.mxu0 0
  %883 = vmatmul.mubr.bf16.gmra.mxu0 %v840
  %v884 = vpop.f32.mrf.mxu0
  %v885 = vadd.f32 %v828, %v884
  %v886 = vpop.f32.mrf.mxu0
  %v887 = vpop.f32.mrf.mxu0
  %v888 = vadd.f32 %v828, %v887
  %v889 = vpop.f32.mrf.mxu0
  %890 = vdwg.mxu0
  %v891 = vlaneseq
  %v892 = vshrl.u32 %v891, 7
  %v893 = vsub.s32 0, %v892
  %v894 = vrot.slane %v807, %v893
  %v895 = vlaneseq
  %v896 = vshrl.u32 %v895, 7
  %v897 = vsub.s32 0, %v896
  %v898 = vrot.slane %v814, %v897
  %v901 = vadd.f32 %v877, %v894
  %v902 = vadd.f32 %v880, %v894
  %v903 = vadd.f32 %v885, %v898
  %v904 = vadd.f32 %v888, %v898
  %v905 = vld [vmem:[%s43] sm:$0xf]
  %v906 = vld [vmem:[%s43 + $0x4] sm:$0xf]
  %v907 = vld [vmem:[%s43 + $0x8] sm:$0xf]
  %v908 = vld [vmem:[%s43 + $0xc] sm:$0xf]
  %v909 = vld [vmem:[%s45] sm:$0x1]
  %v911 = vlaneseq
  %v912 = vshrl.u32 %v911, 7
  %v913 = vsub.s32 0, %v912
  %v914 = vrot.slane %v909, %v913
  %v920 = vunpack.c.l.b16 %v905
  %v921 = vunpack.c.l.b16 %v906
  %v922 = vunpack.c.l.b16 %v907
  %v923 = vunpack.c.l.b16 %v908
  %v924 = vpack.c.b16 %v921, %v920
  %v925 = vpack.c.b16 %v923, %v922
  %928 = vmatprep.subr.bf16.mxu0 0
  %929 = vmatpush1.bf16.msra.mxu0 0
  %930 = vmatprep.subr.bf16.mxu0 0
  %931 = vmatpush1.bf16.msra.mxu0 0
  %932 = vmatprep.subr.bf16.mxu0 0
  %933 = vmatpush1.bf16.msra.mxu0 0
  %934 = vmatprep.subr.bf16.mxu0 0
  %935 = vmatpush1.bf16.msra.mxu0 0
  %936 = vmatprep.subr.bf16.mxu0 0
  %937 = vmatpush1.bf16.msra.mxu0 0
  %938 = vmatprep.subr.bf16.mxu0 0
  %939 = vmatpush1.bf16.msra.mxu0 0
  %940 = vmatprep.subr.bf16.mxu0 0
  %941 = vmatpush1.bf16.msra.mxu0 %v925
  %942 = vmatprep.subr.bf16.mxu0 0
  %943 = vmatpush1.bf16.msra.mxu0 %v924
  %944 = vmatprep.subr.bf16.mxu0 0
  %945 = vmatpush2.bf16.msra.mxu0 0
  %946 = vmatprep.subr.bf16.mxu0 0
  %947 = vmatpush2.bf16.msra.mxu0 0
  %948 = vmatprep.subr.bf16.mxu0 0
  %949 = vmatpush2.bf16.msra.mxu0 0
  %950 = vmatprep.subr.bf16.mxu0 0
  %951 = vmatpush2.bf16.msra.mxu0 0
  %952 = vmatprep.subr.bf16.mxu0 0
  %953 = vmatpush2.bf16.msra.mxu0 0
  %954 = vmatprep.subr.bf16.mxu0 0
  %955 = vmatpush2.bf16.msra.mxu0 0
  %956 = vmatprep.subr.bf16.mxu0 0
  %957 = vmatpush2.bf16.msra.mxu0 0
  %958 = vmatprep.subr.bf16.mxu0 0
  %959 = vmatpush2.bf16.msra.mxu0 0
  %960 = vmatprep.mubr.bf16.mxu0 0
  %961 = vmatmul.mubr.bf16.gmra.mxu0 %v261
  %v962 = vpop.f32.mrf.mxu0
  %v963 = vadd.f32 %v914, %v962
  %v964 = vpop.f32.mrf.mxu0
  %v965 = vpop.f32.mrf.mxu0
  %v966 = vadd.f32 %v914, %v965
  %v967 = vpop.f32.mrf.mxu0
  %968 = vdwg.mxu0
  %969 = vrot.lane.b32.xlu0 %v894, 112
  %v970 = vpop.permute.xlu0 %969
  %971 = vrot.lane.b32.xlu0 %v898, 112
  %v972 = vpop.permute.xlu0 %971
  %v975 = vadd.f32 %v963, %v970
  %v976 = vadd.f32 %v966, %v972
  %v977 = vmul.f32 %v901, %v901
  %v978 = vmul.f32 %v902, %v902
  %v979 = vmul.f32 %v903, %v903
  %v980 = vmul.f32 %v904, %v904
  %v981 = vsel %vm346, %v977, 0.0
  %982 = vadd.xlane.f32.xlu0 %v981
  %v983 = vpop.xlane.xlu0 %982
  %v984 = vsel %vm346, %v978, 0.0
  %985 = vadd.xlane.f32.xlu0 %v984
  %v986 = vpop.xlane.xlu0 %985
  %v987 = vsel %vm346, %v979, 0.0
  %988 = vadd.xlane.f32.xlu0 %v987
  %v989 = vpop.xlane.xlu0 %988
  %v990 = vsel %vm346, %v980, 0.0
  %991 = vadd.xlane.f32.xlu0 %v990
  %v992 = vpop.xlane.xlu0 %991
  %v993 = vmul.f32 %v975, %v975
  %v994 = vmul.f32 %v976, %v976
  %v995 = vsel %vm346, %v993, 0.0
  %996 = vadd.xlane.f32.xlu0 %v995
  %v997 = vpop.xlane.xlu0 %996
  %v998 = vsel %vm346, %v994, 0.0
  %999 = vadd.xlane.f32.xlu0 %v998
  %v1000 = vpop.xlane.xlu0 %999
  %v1002 = vsel %vm346, %v901, 0
  %v1005 = vsel %vm346, %v902, 0
  %v1008 = vsel %vm346, %v975, 0
  %1010 = vmatprep.subr.mxu0 0.0
  %1011 = vmatpush1.xpose.msra.mxu0 0.0
  %1012 = vmatprep.subr.mxu0 0.0
  %1013 = vmatpush1.xpose.msra.mxu0 0.0
  %1014 = vmatprep.subr.mxu0 0.0
  %1015 = vmatpush1.xpose.msra.mxu0 0.0
  %1016 = vmatprep.subr.mxu0 0.0
  %1017 = vmatpush1.xpose.msra.mxu0 0.0
  %1018 = vmatprep.subr.mxu0 0.0
  %1019 = vmatpush1.xpose.msra.mxu0 0.0
  %1020 = vmatprep.subr.mxu0 0.0
  %1021 = vmatpush1.xpose.msra.mxu0 0.0
  %1022 = vmatprep.subr.mxu0 0.0
  %1023 = vmatpush1.xpose.msra.mxu0 0.0
  %1024 = vmatprep.subr.mxu0 0.0
  %1025 = vmatpush1.xpose.msra.mxu0 0.0
  %1026 = vmatprep.subr.mxu0 0.0
  %1027 = vmatpush1.xpose.msra.mxu0 0.0
  %1028 = vmatprep.subr.mxu0 0.0
  %1029 = vmatpush1.xpose.msra.mxu0 0.0
  %1030 = vmatprep.subr.mxu0 0.0
  %1031 = vmatpush1.xpose.msra.mxu0 0.0
  %1032 = vmatprep.subr.mxu0 0.0
  %1033 = vmatpush1.xpose.msra.mxu0 0.0
  %1034 = vmatprep.subr.mxu0 0.0
  %1035 = vmatpush1.xpose.msra.mxu0 0.0
  %1036 = vmatprep.subr.mxu0 0.0
  %1037 = vmatpush1.xpose.msra.mxu0 0.0
  %1038 = vmatprep.subr.mxu0 0.0
  %1039 = vmatpush1.xpose.msra.mxu0 0.0
  %1040 = vmatprep.subr.mxu0 0.0
  %1041 = vmatpush1.xpose.msra.mxu0 %v1008
  %1042 = vmatprep.subr.mxu0 0.0
  %1043 = vmatpush2.xpose.msra.mxu0 0.0
  %1044 = vmatprep.subr.mxu0 0.0
  %1045 = vmatpush2.xpose.msra.mxu0 0.0
  %1046 = vmatprep.subr.mxu0 0.0
  %1047 = vmatpush2.xpose.msra.mxu0 0.0
  %1048 = vmatprep.subr.mxu0 0.0
  %1049 = vmatpush2.xpose.msra.mxu0 0.0
  %1050 = vmatprep.subr.mxu0 0.0
  %1051 = vmatpush2.xpose.msra.mxu0 0.0
  %1052 = vmatprep.subr.mxu0 0.0
  %1053 = vmatpush2.xpose.msra.mxu0 0.0
  %1054 = vmatprep.subr.mxu0 0.0
  %1055 = vmatpush2.xpose.msra.mxu0 0.0
  %1056 = vmatprep.subr.mxu0 0.0
  %1057 = vmatpush2.xpose.msra.mxu0 0.0
  %1058 = vmatprep.subr.mxu0 0.0
  %1059 = vmatpush2.xpose.msra.mxu0 0.0
  %1060 = vmatprep.subr.mxu0 0.0
  %1061 = vmatpush2.xpose.msra.mxu0 0.0
  %1062 = vmatprep.subr.mxu0 0.0
  %1063 = vmatpush2.xpose.msra.mxu0 0.0
  %1064 = vmatprep.subr.mxu0 0.0
  %1065 = vmatpush2.xpose.msra.mxu0 0.0
  %1066 = vmatprep.subr.mxu0 0.0
  %1067 = vmatpush2.xpose.msra.mxu0 0.0
  %1068 = vmatprep.subr.mxu0 0.0
  %1069 = vmatpush2.xpose.msra.mxu0 0.0
  %1070 = vmatprep.subr.mxu0 0.0
  %1071 = vmatpush2.xpose.msra.mxu0 0.0
  %1072 = vmatprep.subr.mxu0 0.0
  %1073 = vmatpush2.xpose.msra.mxu0 0.0
  %1074 = vmatprep.mubr.f32.mxu0 0.0
  %1075 = vmatmul.mubr.f32.gmra.mxu0 %v1002
  %v1076 = vpop.f32.mrf.mxu0
  %v1077 = vadd.f32 0.0, %v1076
  %v1078 = vpop.f32.mrf.mxu0
  %1079 = vmatprep.mubr.f32.mxu0 0.0
  %1080 = vmatmul.mubr.f32.gmra.mxu0 %v1005
  %v1081 = vpop.f32.mrf.mxu0
  %v1082 = vadd.f32 0.0, %v1081
  %v1083 = vpop.f32.mrf.mxu0
  %1084 = vdwg.mxu0
  %v1086 = vsel %vm346, %v903, 0
  %v1089 = vsel %vm346, %v904, 0
  %v1092 = vsel %vm346, %v976, 0
  %1094 = vmatprep.subr.mxu0 0.0
  %1095 = vmatpush1.xpose.msra.mxu0 0.0
  %1096 = vmatprep.subr.mxu0 0.0
  %1097 = vmatpush1.xpose.msra.mxu0 0.0
  %1098 = vmatprep.subr.mxu0 0.0
  %1099 = vmatpush1.xpose.msra.mxu0 0.0
  %1100 = vmatprep.subr.mxu0 0.0
  %1101 = vmatpush1.xpose.msra.mxu0 0.0
  %1102 = vmatprep.subr.mxu0 0.0
  %1103 = vmatpush1.xpose.msra.mxu0 0.0
  %1104 = vmatprep.subr.mxu0 0.0
  %1105 = vmatpush1.xpose.msra.mxu0 0.0
  %1106 = vmatprep.subr.mxu0 0.0
  %1107 = vmatpush1.xpose.msra.mxu0 0.0
  %1108 = vmatprep.subr.mxu0 0.0
  %1109 = vmatpush1.xpose.msra.mxu0 0.0
  %1110 = vmatprep.subr.mxu0 0.0
  %1111 = vmatpush1.xpose.msra.mxu0 0.0
  %1112 = vmatprep.subr.mxu0 0.0
  %1113 = vmatpush1.xpose.msra.mxu0 0.0
  %1114 = vmatprep.subr.mxu0 0.0
  %1115 = vmatpush1.xpose.msra.mxu0 0.0
  %1116 = vmatprep.subr.mxu0 0.0
  %1117 = vmatpush1.xpose.msra.mxu0 0.0
  %1118 = vmatprep.subr.mxu0 0.0
  %1119 = vmatpush1.xpose.msra.mxu0 0.0
  %1120 = vmatprep.subr.mxu0 0.0
  %1121 = vmatpush1.xpose.msra.mxu0 0.0
  %1122 = vmatprep.subr.mxu0 0.0
  %1123 = vmatpush1.xpose.msra.mxu0 0.0
  %1124 = vmatprep.subr.mxu0 0.0
  %1125 = vmatpush1.xpose.msra.mxu0 %v1092
  %1126 = vmatprep.subr.mxu0 0.0
  %1127 = vmatpush2.xpose.msra.mxu0 0.0
  %1128 = vmatprep.subr.mxu0 0.0
  %1129 = vmatpush2.xpose.msra.mxu0 0.0
  %1130 = vmatprep.subr.mxu0 0.0
  %1131 = vmatpush2.xpose.msra.mxu0 0.0
  %1132 = vmatprep.subr.mxu0 0.0
  %1133 = vmatpush2.xpose.msra.mxu0 0.0
  %1134 = vmatprep.subr.mxu0 0.0
  %1135 = vmatpush2.xpose.msra.mxu0 0.0
  %1136 = vmatprep.subr.mxu0 0.0
  %1137 = vmatpush2.xpose.msra.mxu0 0.0
  %1138 = vmatprep.subr.mxu0 0.0
  %1139 = vmatpush2.xpose.msra.mxu0 0.0
  %1140 = vmatprep.subr.mxu0 0.0
  %1141 = vmatpush2.xpose.msra.mxu0 0.0
  %1142 = vmatprep.subr.mxu0 0.0
  %1143 = vmatpush2.xpose.msra.mxu0 0.0
  %1144 = vmatprep.subr.mxu0 0.0
  %1145 = vmatpush2.xpose.msra.mxu0 0.0
  %1146 = vmatprep.subr.mxu0 0.0
  %1147 = vmatpush2.xpose.msra.mxu0 0.0
  %1148 = vmatprep.subr.mxu0 0.0
  %1149 = vmatpush2.xpose.msra.mxu0 0.0
  %1150 = vmatprep.subr.mxu0 0.0
  %1151 = vmatpush2.xpose.msra.mxu0 0.0
  %1152 = vmatprep.subr.mxu0 0.0
  %1153 = vmatpush2.xpose.msra.mxu0 0.0
  %1154 = vmatprep.subr.mxu0 0.0
  %1155 = vmatpush2.xpose.msra.mxu0 0.0
  %1156 = vmatprep.subr.mxu0 0.0
  %1157 = vmatpush2.xpose.msra.mxu0 0.0
  %1158 = vmatprep.mubr.f32.mxu0 0.0
  %1159 = vmatmul.mubr.f32.gmra.mxu0 %v1086
  %v1160 = vpop.f32.mrf.mxu0
  %v1161 = vadd.f32 0.0, %v1160
  %v1162 = vpop.f32.mrf.mxu0
  %1163 = vmatprep.mubr.f32.mxu0 0.0
  %1164 = vmatmul.mubr.f32.gmra.mxu0 %v1089
  %v1165 = vpop.f32.mrf.mxu0
  %v1166 = vadd.f32 0.0, %v1165
  %v1167 = vpop.f32.mrf.mxu0
  %1168 = vdwg.mxu0
  %v1171 = vlaneseq
  %v1172 = vand.u32 %v1171, 127
  %v1173 = vlaneseq
  %v1174 = vshrl.u32 %v1173, 7
  %v1175 = vsub.s32 %v1172, %v1174
  %v1176 = vrot.slane %v997, %v1175
  %v1177 = vlaneseq
  %v1178 = vshrl.u32 %v1177, 7
  %v1179 = vsub.s32 %v1172, %v1178
  %v1180 = vrot.slane %v1000, %v1179
  %vm1181 = vcmask 1041409
  %vm1182 = vcmask 1042434
  %v1183 = vsel %vm1182, %v1176, %v1176
  %vm1184 = vcmask 1043459
  %v1185 = vsel %vm1184, %v1176, %v1183
  %vm1186 = vcmask 1044484
  %v1187 = vsel %vm1186, %v1176, %v1185
  %vm1188 = vcmask 1045509
  %v1189 = vsel %vm1188, %v1176, %v1187
  %vm1190 = vcmask 1046534
  %v1191 = vsel %vm1190, %v1176, %v1189
  %vm1192 = vcmask 1047559
  %v1193 = vsel %vm1192, %v1176, %v1191
  %v1194 = vsel %vm1182, %v1180, %v1180
  %v1195 = vsel %vm1184, %v1180, %v1194
  %v1196 = vsel %vm1186, %v1180, %v1195
  %v1197 = vsel %vm1188, %v1180, %v1196
  %v1198 = vsel %vm1190, %v1180, %v1197
  %v1199 = vsel %vm1192, %v1180, %v1198
  %v1202 = vadd.f32 %v983, %v1193
  %v1203 = vadd.f32 %v986, %v1193
  %v1204 = vadd.f32 %v989, %v1199
  %v1205 = vadd.f32 %v992, %v1199
  %v1206 = vmul.f32 %v1077, 2.0
  %v1207 = vmul.f32 %v1082, 2.0
  %v1208 = vmul.f32 %v1161, 2.0
  %v1209 = vmul.f32 %v1166, 2.0
  %v1210 = vsub.f32 %v1202, %v1206
  %v1211 = vsub.f32 %v1203, %v1207
  %v1212 = vsub.f32 %v1204, %v1208
  %v1213 = vsub.f32 %v1205, %v1209
  %v1214 = vmul.f32 %v1210, -0.0005
  %v1215 = vmul.f32 %v1211, -0.0005
  %v1216 = vmul.f32 %v1212, -0.0005
  %v1217 = vmul.f32 %v1213, -0.0005
  %v1218 = vld [vmem:[%s7] sm:$0x1]
  %v1219 = vld [vmem:[%s7 + $0x1] sm:$0x1]
  %v1220 = vmul.f32 %v1218, 1e+09
  %v1221 = vmul.f32 %v1219, 1e+09
  %v1224 = vlaneseq
  %v1225 = vshrl.u32 %v1224, 7
  %v1226 = vsub.s32 0, %v1225
  %v1227 = vrot.slane %v1220, %v1226
  %v1228 = vlaneseq
  %v1229 = vshrl.u32 %v1228, 7
  %v1230 = vsub.s32 0, %v1229
  %v1231 = vrot.slane %v1221, %v1230
  %v1234 = vsub.f32 %v1214, %v1227
  %v1235 = vsub.f32 %v1215, %v1227
  %v1236 = vsub.f32 %v1216, %v1231
  %v1237 = vsub.f32 %v1217, %v1231
  %vm1238 = vcmask 64512
  %v1239 = vsel %vm1238, %v1234, -inf
  %1240 = vmax.xlane.f32.xlu0 %v1239
  %v1241 = vpop.xlane.xlu0 %1240
  %v1242 = vsel %vm1238, %v1235, -inf
  %1243 = vmax.xlane.f32.xlu0 %v1242
  %v1244 = vpop.xlane.xlu0 %1243
  %v1245 = vsel %vm1238, %v1236, -inf
  %1246 = vmax.xlane.f32.xlu0 %v1245
  %v1247 = vpop.xlane.xlu0 %1246
  %v1248 = vsel %vm1238, %v1237, -inf
  %1249 = vmax.xlane.f32.xlu0 %v1248
  %v1250 = vpop.xlane.xlu0 %1249
  %v1251 = vsub.f32 %v1234, %v1241
  %v1252 = vsub.f32 %v1235, %v1244
  %v1253 = vsub.f32 %v1236, %v1247
  %v1254 = vsub.f32 %v1237, %v1250
  %v1255 = vmul.f32 %v1251, 1.442695
  %v1256 = vpow.pop %v1255
  %v1257 = vmul.f32 %v1252, 1.442695
  %v1258 = vpow.pop %v1257
  %v1259 = vmul.f32 %v1253, 1.442695
  %v1260 = vpow.pop %v1259
  %v1261 = vmul.f32 %v1254, 1.442695
  %v1262 = vpow.pop %v1261
  %v1263 = vsel %vm1238, %v1256, 0.0
  %1264 = vadd.xlane.f32.xlu0 %v1263
  %v1265 = vpop.xlane.xlu0 %1264
  %v1266 = vsel %vm1238, %v1258, 0.0
  %1267 = vadd.xlane.f32.xlu0 %v1266
  %v1268 = vpop.xlane.xlu0 %1267
  %v1269 = vsel %vm1238, %v1260, 0.0
  %1270 = vadd.xlane.f32.xlu0 %v1269
  %v1271 = vpop.xlane.xlu0 %1270
  %v1272 = vsel %vm1238, %v1262, 0.0
  %1273 = vadd.xlane.f32.xlu0 %v1272
  %v1274 = vpop.xlane.xlu0 %1273
  %v1275 = vrcp.pop %v1265
  %v1276 = vrcp.pop %v1268
  %v1277 = vrcp.pop %v1271
  %v1278 = vrcp.pop %v1274
  %v1279 = vmul.f32 %v1256, %v1275
  %v1280 = vmul.f32 %v1258, %v1276
  %v1281 = vmul.f32 %v1260, %v1277
  %v1282 = vmul.f32 %v1262, %v1278
  %v1283 = vlog2.pop %v1265
  %v1284 = vmul.f32 %v1283, 0.6931472
  %v1285 = vlog2.pop %v1268
  %v1286 = vmul.f32 %v1285, 0.6931472
  %v1287 = vlog2.pop %v1271
  %v1288 = vmul.f32 %v1287, 0.6931472
  %v1289 = vlog2.pop %v1274
  %v1290 = vmul.f32 %v1289, 0.6931472
  %v1291 = vadd.f32 %v1241, %v1284
  %v1292 = vadd.f32 %v1244, %v1286
  %v1293 = vadd.f32 %v1247, %v1288
  %v1294 = vadd.f32 %v1250, %v1290
  %v1295 = vsub.f32 %v1234, %v1291
  %v1296 = vsub.f32 %v1235, %v1292
  %v1297 = vsub.f32 %v1236, %v1293
  %v1298 = vsub.f32 %v1237, %v1294
  %v1299 = vld [vmem:[%s17] sm:$0xff]
  %v1300 = vld [vmem:[%s17 + $0x8] sm:$0xff]
  %v1301 = vld [vmem:[%s17 + $0x10] sm:$0xff]
  %v1302 = vld [vmem:[%s17 + $0x18] sm:$0xff]
  %vm1303 = vcmp.ge.f32.partialorder %v1234, %v1241
  %vm1304 = vcmp.ge.f32.partialorder %v1235, %v1244
  %vm1305 = vcmp.ge.f32.partialorder %v1236, %v1247
  %vm1306 = vcmp.ge.f32.partialorder %v1237, %v1250
  %v1307 = vsub.s32 0, %v1172
  %v1308 = vsel %vm1303, %v1307, 4294967288
  %v1309 = vsel %vm1304, %v1307, 4294967288
  %v1310 = vsel %vm1305, %v1307, 4294967288
  %v1311 = vsel %vm1306, %v1307, 4294967288
  %v1312 = vsel %vm1238, %v1308, 2147483648
  %v1313 = vand.u32 %v1312, 65535
  %v1314 = vshra.s32 %v1312, 16
  %v1315 = vcvt.s32.f32 %v1313
  %v1316 = vcvt.s32.f32 %v1314
  %1317 = vmax.xlane.f32.xlu0 %v1316
  %v1318 = vpop.xlane.xlu0 %1317
  %vm1319 = vcmp.eq.f32.partialorder %v1316, %v1318
  %v1320 = vsel %vm1319, %v1315, -inf
  %1321 = vmax.xlane.f32.xlu0 %v1320
  %v1322 = vpop.xlane.xlu0 %1321
  %v1323 = vcvt.f32.s32 %v1322
  %v1324 = vcvt.f32.s32 %v1318
  %v1325 = vshll.u32 %v1324, 16
  %v1326 = vadd.s32 %v1325, %v1323
  %v1327 = vsel %vm1238, %v1309, 2147483648
  %v1328 = vand.u32 %v1327, 65535
  %v1329 = vshra.s32 %v1327, 16
  %v1330 = vcvt.s32.f32 %v1328
  %v1331 = vcvt.s32.f32 %v1329
  %1332 = vmax.xlane.f32.xlu0 %v1331
  %v1333 = vpop.xlane.xlu0 %1332
  %vm1334 = vcmp.eq.f32.partialorder %v1331, %v1333
  %v1335 = vsel %vm1334, %v1330, -inf
  %1336 = vmax.xlane.f32.xlu0 %v1335
  %v1337 = vpop.xlane.xlu0 %1336
  %v1338 = vcvt.f32.s32 %v1337
  %v1339 = vcvt.f32.s32 %v1333
  %v1340 = vshll.u32 %v1339, 16
  %v1341 = vadd.s32 %v1340, %v1338
  %v1342 = vsel %vm1238, %v1310, 2147483648
  %v1343 = vand.u32 %v1342, 65535
  %v1344 = vshra.s32 %v1342, 16
  %v1345 = vcvt.s32.f32 %v1343
  %v1346 = vcvt.s32.f32 %v1344
  %1347 = vmax.xlane.f32.xlu0 %v1346
  %v1348 = vpop.xlane.xlu0 %1347
  %vm1349 = vcmp.eq.f32.partialorder %v1346, %v1348
  %v1350 = vsel %vm1349, %v1345, -inf
  %1351 = vmax.xlane.f32.xlu0 %v1350
  %v1352 = vpop.xlane.xlu0 %1351
  %v1353 = vcvt.f32.s32 %v1352
  %v1354 = vcvt.f32.s32 %v1348
  %v1355 = vshll.u32 %v1354, 16
  %v1356 = vadd.s32 %v1355, %v1353
  %v1357 = vsel %vm1238, %v1311, 2147483648
  %v1358 = vand.u32 %v1357, 65535
  %v1359 = vshra.s32 %v1357, 16
  %v1360 = vcvt.s32.f32 %v1358
  %v1361 = vcvt.s32.f32 %v1359
  %1362 = vmax.xlane.f32.xlu0 %v1361
  %v1363 = vpop.xlane.xlu0 %1362
  %vm1364 = vcmp.eq.f32.partialorder %v1361, %v1363
  %v1365 = vsel %vm1364, %v1360, -inf
  %1366 = vmax.xlane.f32.xlu0 %v1365
  %v1367 = vpop.xlane.xlu0 %1366
  %v1368 = vcvt.f32.s32 %v1367
  %v1369 = vcvt.f32.s32 %v1363
  %v1370 = vshll.u32 %v1369, 16
  %v1371 = vadd.s32 %v1370, %v1368
  %v1372 = vsub.s32 0, %v1326
  %v1373 = vsub.s32 0, %v1341
  %v1374 = vsub.s32 0, %v1356
  %v1375 = vsub.s32 0, %v1371
  %vm1376 = vcmp.eq.s32.totalorder %v1172, %v1372
  %vm1377 = vcmp.eq.s32.totalorder %v1172, %v1373
  %vm1378 = vcmp.eq.s32.totalorder %v1172, %v1374
  %vm1379 = vcmp.eq.s32.totalorder %v1172, %v1375
  %v1380 = vsel %vm1376, 1, 0
  %v1381 = vsel %vm1377, 1, 0
  %v1382 = vsel %vm1378, 1, 0
  %v1383 = vsel %vm1379, 1, 0
  %v1384 = vcvt.s32.f32 %v1380
  %v1385 = vcvt.s32.f32 %v1381
  %v1386 = vcvt.s32.f32 %v1382
  %v1387 = vcvt.s32.f32 %v1383
  %1389 = vset.pattern.permute.xlu0 0
  %1390 = vperm.xlu0 %1389, %v1299
  %v1391 = vpop.permute.xlu0 %1390
  %1394 = vset.pattern.permute.xlu0 0
  %1395 = vperm.xlu0 %1394, %v1300
  %v1396 = vpop.permute.xlu0 %1395
  %1399 = vset.pattern.permute.xlu0 0
  %1400 = vperm.xlu0 %1399, %v1301
  %v1401 = vpop.permute.xlu0 %1400
  %1404 = vset.pattern.permute.xlu0 0
  %1405 = vperm.xlu0 %1404, %v1302
  %v1406 = vpop.permute.xlu0 %1405
  %v1408 = vmul.f32 %v1384, %v1391
  %v1409 = vmul.f32 %v1385, %v1396
  %v1410 = vmul.f32 %v1386, %v1401
  %v1411 = vmul.f32 %v1387, %v1406
  %v1412 = vsel %vm1238, %v1408, 0.0
  %v1413 = vsel %vm1238, %v1409, 0.0
  %v1414 = vadd.f32 %v1412, %v1413
  %v1415 = vrot.slane %v1414, 4
  %v1416 = vadd.f32 %v1414, %v1415
  %v1417 = vrot.slane %v1416, 2
  %v1418 = vadd.f32 %v1416, %v1417
  %v1419 = vrot.slane %v1418, 1
  %v1420 = vadd.f32 %v1418, %v1419
  %v1421 = vsel %vm1238, %v1410, 0.0
  %v1422 = vsel %vm1238, %v1411, 0.0
  %v1423 = vadd.f32 %v1421, %v1422
  %v1424 = vrot.slane %v1423, 4
  %v1425 = vadd.f32 %v1423, %v1424
  %v1426 = vrot.slane %v1425, 2
  %v1427 = vadd.f32 %v1425, %v1426
  %v1428 = vrot.slane %v1427, 1
  %v1429 = vadd.f32 %v1427, %v1428
  %v1430 = vpack.c.bf16 %v1280, %v1279
  %v1431 = vpack.c.bf16 %v1282, %v1281
  %v1432 = vpack.c.bf16 %v304, %v304
  %v1433 = vpack.c.bf16 %v305, %v305
  %v1435 = vsel %vm1238, %v1430, 0
  %vm1437 = vcmask 1043456
  %v1439 = vsel %vm1437, %v1432, 0
  %1441 = vmatprep.subr.bf16.mxu0 0
  %1442 = vmatpush1.bf16.msra.mxu0 0
  %1443 = vmatprep.subr.bf16.mxu0 0
  %1444 = vmatpush1.bf16.msra.mxu0 0
  %1445 = vmatprep.subr.bf16.mxu0 0
  %1446 = vmatpush1.bf16.msra.mxu0 0
  %1447 = vmatprep.subr.bf16.mxu0 0
  %1448 = vmatpush1.bf16.msra.mxu0 0
  %1449 = vmatprep.subr.bf16.mxu0 0
  %1450 = vmatpush1.bf16.msra.mxu0 0
  %1451 = vmatprep.subr.bf16.mxu0 0
  %1452 = vmatpush1.bf16.msra.mxu0 0
  %1453 = vmatprep.subr.bf16.mxu0 0
  %1454 = vmatpush1.bf16.msra.mxu0 0
  %1455 = vmatprep.subr.bf16.mxu0 0
  %1456 = vmatpush1.bf16.msra.mxu0 %v1439
  %1457 = vmatprep.subr.bf16.mxu0 0
  %1458 = vmatpush2.bf16.msra.mxu0 0
  %1459 = vmatprep.subr.bf16.mxu0 0
  %1460 = vmatpush2.bf16.msra.mxu0 0
  %1461 = vmatprep.subr.bf16.mxu0 0
  %1462 = vmatpush2.bf16.msra.mxu0 0
  %1463 = vmatprep.subr.bf16.mxu0 0
  %1464 = vmatpush2.bf16.msra.mxu0 0
  %1465 = vmatprep.subr.bf16.mxu0 0
  %1466 = vmatpush2.bf16.msra.mxu0 0
  %1467 = vmatprep.subr.bf16.mxu0 0
  %1468 = vmatpush2.bf16.msra.mxu0 0
  %1469 = vmatprep.subr.bf16.mxu0 0
  %1470 = vmatpush2.bf16.msra.mxu0 0
  %1471 = vmatprep.subr.bf16.mxu0 0
  %1472 = vmatpush2.bf16.msra.mxu0 0
  %1473 = vmatprep.mubr.bf16.mxu0 0
  %1474 = vmatmul.mubr.bf16.gmra.mxu0 %v1435
  %v1475 = vpop.f32.mrf.mxu0
  %v1476 = vadd.f32 0.0, %v1475
  %v1477 = vpop.f32.mrf.mxu0
  %v1478 = vpop.f32.mrf.mxu0
  %v1479 = vadd.f32 0.0, %v1478
  %v1480 = vpop.f32.mrf.mxu0
  %1481 = vdwg.mxu0
  %v1483 = vsel %vm1238, %v1431, 0
  %v1486 = vsel %vm1437, %v1433, 0
  %1488 = vmatprep.subr.bf16.mxu0 0
  %1489 = vmatpush1.bf16.msra.mxu0 0
  %1490 = vmatprep.subr.bf16.mxu0 0
  %1491 = vmatpush1.bf16.msra.mxu0 0
  %1492 = vmatprep.subr.bf16.mxu0 0
  %1493 = vmatpush1.bf16.msra.mxu0 0
  %1494 = vmatprep.subr.bf16.mxu0 0
  %1495 = vmatpush1.bf16.msra.mxu0 0
  %1496 = vmatprep.subr.bf16.mxu0 0
  %1497 = vmatpush1.bf16.msra.mxu0 0
  %1498 = vmatprep.subr.bf16.mxu0 0
  %1499 = vmatpush1.bf16.msra.mxu0 0
  %1500 = vmatprep.subr.bf16.mxu0 0
  %1501 = vmatpush1.bf16.msra.mxu0 0
  %1502 = vmatprep.subr.bf16.mxu0 0
  %1503 = vmatpush1.bf16.msra.mxu0 %v1486
  %1504 = vmatprep.subr.bf16.mxu0 0
  %1505 = vmatpush2.bf16.msra.mxu0 0
  %1506 = vmatprep.subr.bf16.mxu0 0
  %1507 = vmatpush2.bf16.msra.mxu0 0
  %1508 = vmatprep.subr.bf16.mxu0 0
  %1509 = vmatpush2.bf16.msra.mxu0 0
  %1510 = vmatprep.subr.bf16.mxu0 0
  %1511 = vmatpush2.bf16.msra.mxu0 0
  %1512 = vmatprep.subr.bf16.mxu0 0
  %1513 = vmatpush2.bf16.msra.mxu0 0
  %1514 = vmatprep.subr.bf16.mxu0 0
  %1515 = vmatpush2.bf16.msra.mxu0 0
  %1516 = vmatprep.subr.bf16.mxu0 0
  %1517 = vmatpush2.bf16.msra.mxu0 0
  %1518 = vmatprep.subr.bf16.mxu0 0
  %1519 = vmatpush2.bf16.msra.mxu0 0
  %1520 = vmatprep.mubr.bf16.mxu0 0
  %1521 = vmatmul.mubr.bf16.gmra.mxu0 %v1483
  %v1522 = vpop.f32.mrf.mxu0
  %v1523 = vadd.f32 0.0, %v1522
  %v1524 = vpop.f32.mrf.mxu0
  %v1525 = vpop.f32.mrf.mxu0
  %v1526 = vadd.f32 0.0, %v1525
  %v1527 = vpop.f32.mrf.mxu0
  %1528 = vdwg.mxu0
  %v1529 = vld [vmem:[%s9] sm:$0xff]
  %v1530 = vld [vmem:[%s9 + $0x8] sm:$0xff]
  %v1531 = vld [vmem:[%s9 + $0x10] sm:$0xff]
  %v1532 = vld [vmem:[%s9 + $0x18] sm:$0xff]
  %v1533 = vld [vmem:[%s11] sm:$0xff]
  %v1534 = vld [vmem:[%s11 + $0x8] sm:$0xff]
  %v1535 = vld [vmem:[%s11 + $0x10] sm:$0xff]
  %v1536 = vld [vmem:[%s11 + $0x18] sm:$0xff]
  %v1537 = vmul.f32 %v1533, 0.9999
  %v1538 = vmul.f32 %v1534, 0.9999
  %v1539 = vmul.f32 %v1535, 0.9999
  %v1540 = vmul.f32 %v1536, 0.9999
  %v1541 = vsub.f32 %v1529, %v1537
  %v1542 = vsub.f32 %v1530, %v1538
  %v1543 = vsub.f32 %v1531, %v1539
  %v1544 = vsub.f32 %v1532, %v1540
  %v1545 = vmul.f32 %v1541, %v1391
  %v1546 = vmul.f32 %v1542, %v1396
  %v1547 = vmul.f32 %v1543, %v1401
  %v1548 = vmul.f32 %v1544, %v1406
  %v1549 = vld [vmem:[%s13] sm:$0x1]
  %v1550 = vld [vmem:[%s13 + $0x1] sm:$0x1]
  %v1553 = vlaneseq
  %v1554 = vshrl.u32 %v1553, 7
  %v1555 = vsub.s32 0, %v1554
  %v1556 = vrot.slane %v1549, %v1555
  %v1557 = vlaneseq
  %v1558 = vshrl.u32 %v1557, 7
  %v1559 = vsub.s32 0, %v1558
  %v1560 = vrot.slane %v1550, %v1559
  %v1563 = vmul.f32 %v1556, 0.9999
  %v1564 = vmul.f32 %v1560, 0.9999
  %v1565 = vsub.f32 1.0, %v1563
  %v1566 = vsub.f32 1.0, %v1564
  %1568 = vset.pattern.permute.xlu0 0
  %1569 = vperm.xlu0 %1568, %v1565
  %v1570 = vpop.permute.xlu0 %1569
  %1573 = vset.pattern.permute.xlu0 0
  %1574 = vperm.xlu0 %1573, %v1566
  %v1575 = vpop.permute.xlu0 %1574
  %v1577 = vmul.f32 %v1570, %v1533
  %v1578 = vmul.f32 %v1570, %v1534
  %v1579 = vmul.f32 %v1575, %v1535
  %v1580 = vmul.f32 %v1575, %v1536
  %1581 = vset.pattern.permute.xlu0 0
  %1582 = vperm.xlu0 %1581, %v1556
  %v1583 = vpop.permute.xlu0 %1582
  %1585 = vset.pattern.permute.xlu0 0
  %1586 = vperm.xlu0 %1585, %v1560
  %v1587 = vpop.permute.xlu0 %1586
  %v1589 = vmul.f32 %v1583, %v1529
  %v1590 = vmul.f32 %v1583, %v1530
  %v1591 = vmul.f32 %v1587, %v1531
  %v1592 = vmul.f32 %v1587, %v1532
  %v1593 = vadd.f32 %v1577, %v1589
  %v1594 = vadd.f32 %v1578, %v1590
  %v1595 = vadd.f32 %v1579, %v1591
  %v1596 = vadd.f32 %v1580, %v1592
  %v1597 = vld [vmem:[%s53] sm:$0xf]
  %v1598 = vld [vmem:[%s53 + $0x4] sm:$0xf]
  %v1599 = vld [vmem:[%s55] sm:$0x1]
  %v1601 = vlaneseq
  %v1602 = vshrl.u32 %v1601, 7
  %v1603 = vsub.s32 0, %v1602
  %v1604 = vrot.slane %v1599, %v1603
  %v1608 = vunpack.c.l.b16 %v1597
  %v1609 = vunpack.c.l.b16 %v1598
  %v1610 = vpack.c.b16 %v1609, %v1608
  %1612 = vmatprep.subr.bf16.mxu0 0
  %1613 = vmatpush1.bf16.msra.mxu0 0
  %1614 = vmatprep.subr.bf16.mxu0 0
  %1615 = vmatpush1.bf16.msra.mxu0 0
  %1616 = vmatprep.subr.bf16.mxu0 0
  %1617 = vmatpush1.bf16.msra.mxu0 0
  %1618 = vmatprep.subr.bf16.mxu0 0
  %1619 = vmatpush1.bf16.msra.mxu0 0
  %1620 = vmatprep.subr.bf16.mxu0 0
  %1621 = vmatpush1.bf16.msra.mxu0 0
  %1622 = vmatprep.subr.bf16.mxu0 0
  %1623 = vmatpush1.bf16.msra.mxu0 0
  %1624 = vmatprep.subr.bf16.mxu0 0
  %1625 = vmatpush1.bf16.msra.mxu0 0
  %1626 = vmatprep.subr.bf16.mxu0 0
  %1627 = vmatpush1.bf16.msra.mxu0 %v1610
  %1628 = vmatprep.subr.bf16.mxu0 0
  %1629 = vmatpush2.bf16.msra.mxu0 0
  %1630 = vmatprep.subr.bf16.mxu0 0
  %1631 = vmatpush2.bf16.msra.mxu0 0
  %1632 = vmatprep.subr.bf16.mxu0 0
  %1633 = vmatpush2.bf16.msra.mxu0 0
  %1634 = vmatprep.subr.bf16.mxu0 0
  %1635 = vmatpush2.bf16.msra.mxu0 0
  %1636 = vmatprep.subr.bf16.mxu0 0
  %1637 = vmatpush2.bf16.msra.mxu0 0
  %1638 = vmatprep.subr.bf16.mxu0 0
  %1639 = vmatpush2.bf16.msra.mxu0 0
  %1640 = vmatprep.subr.bf16.mxu0 0
  %1641 = vmatpush2.bf16.msra.mxu0 0
  %1642 = vmatprep.subr.bf16.mxu0 0
  %1643 = vmatpush2.bf16.msra.mxu0 0
  %1644 = vmatprep.mubr.bf16.mxu0 0
  %1645 = vmatmul.mubr.bf16.gmra.mxu0 %v750
  %v1646 = vpop.f32.mrf.mxu0
  %v1647 = vadd.f32 %v1604, %v1646
  %v1648 = vpop.f32.mrf.mxu0
  %v1649 = vpop.f32.mrf.mxu0
  %v1650 = vpop.f32.mrf.mxu0
  %1651 = vdwg.mxu0
  %v1652 = vld [vmem:[%s51] sm:$0x1]
  %1653 = vset.pattern.permute.xlu0 0
  %1654 = vperm.xlu0 %1653, %v1549
  %v1655 = vpop.permute.xlu0 %1654
  %v1657 = vlaneseq
  %v1658 = vshrl.u32 %v1657, 7
  %v1659 = vsub.s32 0, %v1658
  %v1660 = vrot.slane %v1655, %v1659
  %1661 = vset.pattern.permute.xlu0 0
  %1662 = vperm.xlu0 %1661, %v1550
  %v1663 = vpop.permute.xlu0 %1662
  %v1665 = vlaneseq
  %v1666 = vshrl.u32 %v1665, 7
  %v1667 = vsub.s32 0, %v1666
  %v1668 = vrot.slane %v1663, %v1667
  %v1669 = vmul.f32 %v1660, %v1652
  %v1670 = vmul.f32 %v1668, %v1652
  %v1673 = vunpack.c.l.s4 1966171168
  %v1674 = vunpack.c.0.s8 %v1673
  %v1675 = vlaneseq
  %v1676 = vshrl.u32 %v1675, 7
  %v1677 = vsub.s32 %v1674, %v1676
  %v1678 = vrot.slane %v1647, %v1677
  %v1679 = vcombine.high %v1678, %v1678
  %v1681 = vunpack.c.l.s4 1966171168
  %v1682 = vunpack.c.0.s8 %v1681
  %v1683 = vlaneseq
  %v1684 = vshrl.u32 %v1683, 7
  %v1685 = vsub.s32 %v1682, %v1684
  %v1686 = vrot.slane %v1678, %v1685
  %v1688 = vunpack.c.l.s4 1966171168
  %v1689 = vunpack.c.0.s8 %v1688
  %v1690 = vlaneseq
  %v1691 = vshrl.u32 %v1690, 7
  %v1692 = vsub.s32 %v1689, %v1691
  %v1693 = vrot.slane %v1679, %v1692
  %v1696 = vadd.f32 %v1669, %v1686
  %v1697 = vadd.f32 %v1670, %v1693
  %1702 = vrot.lane.b32.xlu0 %v1476, 16
  %v1703 = vpop.permute.xlu0 %1702
  %1704 = vrot.lane.b32.xlu0 %v1479, 16
  %v1705 = vpop.permute.xlu0 %1704
  %1706 = vrot.lane.b32.xlu0 %v1523, 16
  %v1707 = vpop.permute.xlu0 %1706
  %1708 = vrot.lane.b32.xlu0 %v1526, 16
  %v1709 = vpop.permute.xlu0 %1708
  %v1714 = vsel %vm346, %v1593, %v1703
  %v1715 = vsel %vm346, %v1594, %v1705
  %v1716 = vsel %vm346, %v1595, %v1707
  %v1717 = vsel %vm346, %v1596, %v1709
  %v1720 = vlaneseq
  %v1721 = vshrl.u32 %v1720, 7
  %v1722 = vsub.s32 0, %v1721
  %v1723 = vrot.slane %v1696, %v1722
  %v1724 = vlaneseq
  %v1725 = vshrl.u32 %v1724, 7
  %v1726 = vsub.s32 0, %v1725
  %v1727 = vrot.slane %v1697, %v1726
  %v1730 = vadd.f32 %v1714, %v1723
  %v1731 = vadd.f32 %v1715, %v1723
  %v1732 = vadd.f32 %v1716, %v1727
  %v1733 = vadd.f32 %v1717, %v1727
  %v1738 = vrot.slane %v1730, 7
  %v1739 = vrot.slane %v1731, 7
  %v1740 = vsel %vm326, %v1738, %v1739
  %v1741 = vrot.slane %v1732, 7
  %v1742 = vrot.slane %v1733, 7
  %v1743 = vsel %vm326, %v1741, %v1742
  %v1748 = vsel %vm326, 0.0, %v1738
  %v1749 = vsel %vm326, 0.0, %v1741
  %v1750 = vrot.slane %v1730, 1
  %v1751 = vrot.slane %v1731, 1
  %v1752 = vsel %vm333, %v1750, %v1751
  %v1753 = vrot.slane %v1732, 1
  %v1754 = vrot.slane %v1733, 1
  %v1755 = vsel %vm333, %v1753, %v1754
  %v1760 = vsel %vm333, %v1751, 0.0
  %v1761 = vsel %vm333, %v1754, 0.0
  %v1762 = vld [vmem:[%s59] sm:$0x1]
  %v1763 = vpack.c.bf16 %v1740, %v1748
  %v1764 = vpack.c.bf16 %v1743, %v1749
  %v1765 = vld [vmem:[%s57] sm:$0xf]
  %v1766 = vld [vmem:[%s57 + $0x4] sm:$0xf]
  %v1767 = vld [vmem:[%s57 + $0x8] sm:$0xf]
  %v1768 = vld [vmem:[%s57 + $0xc] sm:$0xf]
  %v1773 = vunpack.c.l.b16 %v1765
  %v1774 = vunpack.c.l.b16 %v1766
  %v1775 = vunpack.c.l.b16 %v1767
  %v1776 = vunpack.c.l.b16 %v1768
  %v1777 = vpack.c.b16 %v1774, %v1773
  %v1778 = vpack.c.b16 %v1776, %v1775
  %v1782 = vsel %vm259, %v1763, 0
  %v1785 = vsel %vm259, %v1764, 0
  %1787 = vmatprep.subr.bf16.mxu0 0
  %1788 = vmatpush1.bf16.msra.mxu0 0
  %1789 = vmatprep.subr.bf16.mxu0 0
  %1790 = vmatpush1.bf16.msra.mxu0 0
  %1791 = vmatprep.subr.bf16.mxu0 0
  %1792 = vmatpush1.bf16.msra.mxu0 0
  %1793 = vmatprep.subr.bf16.mxu0 0
  %1794 = vmatpush1.bf16.msra.mxu0 0
  %1795 = vmatprep.subr.bf16.mxu0 0
  %1796 = vmatpush1.bf16.msra.mxu0 0
  %1797 = vmatprep.subr.bf16.mxu0 0
  %1798 = vmatpush1.bf16.msra.mxu0 0
  %1799 = vmatprep.subr.bf16.mxu0 0
  %1800 = vmatpush1.bf16.msra.mxu0 %v1778
  %1801 = vmatprep.subr.bf16.mxu0 0
  %1802 = vmatpush1.bf16.msra.mxu0 %v1777
  %1803 = vmatprep.subr.bf16.mxu0 0
  %1804 = vmatpush2.bf16.msra.mxu0 0
  %1805 = vmatprep.subr.bf16.mxu0 0
  %1806 = vmatpush2.bf16.msra.mxu0 0
  %1807 = vmatprep.subr.bf16.mxu0 0
  %1808 = vmatpush2.bf16.msra.mxu0 0
  %1809 = vmatprep.subr.bf16.mxu0 0
  %1810 = vmatpush2.bf16.msra.mxu0 0
  %1811 = vmatprep.subr.bf16.mxu0 0
  %1812 = vmatpush2.bf16.msra.mxu0 0
  %1813 = vmatprep.subr.bf16.mxu0 0
  %1814 = vmatpush2.bf16.msra.mxu0 0
  %1815 = vmatprep.subr.bf16.mxu0 0
  %1816 = vmatpush2.bf16.msra.mxu0 0
  %1817 = vmatprep.subr.bf16.mxu0 0
  %1818 = vmatpush2.bf16.msra.mxu0 0
  %1819 = vmatprep.mubr.bf16.mxu0 0
  %1820 = vmatmul.mubr.bf16.gmra.mxu0 %v1782
  %v1821 = vpop.f32.mrf.mxu0
  %v1822 = vadd.f32 0.0, %v1821
  %v1823 = vpop.f32.mrf.mxu0
  %v1824 = vpop.f32.mrf.mxu0
  %v1825 = vadd.f32 0.0, %v1824
  %v1826 = vpop.f32.mrf.mxu0
  %1827 = vmatprep.mubr.bf16.mxu0 0
  %1828 = vmatmul.mubr.bf16.gmra.mxu0 %v1785
  %v1829 = vpop.f32.mrf.mxu0
  %v1830 = vadd.f32 0.0, %v1829
  %v1831 = vpop.f32.mrf.mxu0
  %v1832 = vpop.f32.mrf.mxu0
  %v1833 = vadd.f32 0.0, %v1832
  %v1834 = vpop.f32.mrf.mxu0
  %1835 = vdwg.mxu0
  %v1837 = vlaneseq
  %v1838 = vshrl.u32 %v1837, 7
  %v1839 = vsub.s32 0, %v1838
  %v1840 = vrot.slane %v1762, %v1839
  %v1842 = vadd.f32 %v1840, %v1822
  %v1843 = vadd.f32 %v1840, %v1825
  %v1844 = vadd.f32 %v1840, %v1830
  %v1845 = vadd.f32 %v1840, %v1833
  %v1846 = vpack.c.bf16 %v1731, %v1730
  %v1847 = vpack.c.bf16 %v1733, %v1732
  %v1848 = vld [vmem:[%s57 + $0x10] sm:$0xf]
  %v1849 = vld [vmem:[%s57 + $0x14] sm:$0xf]
  %v1850 = vld [vmem:[%s57 + $0x18] sm:$0xf]
  %v1851 = vld [vmem:[%s57 + $0x1c] sm:$0xf]
  %v1856 = vunpack.c.l.b16 %v1848
  %v1857 = vunpack.c.l.b16 %v1849
  %v1858 = vunpack.c.l.b16 %v1850
  %v1859 = vunpack.c.l.b16 %v1851
  %v1860 = vpack.c.b16 %v1857, %v1856
  %v1861 = vpack.c.b16 %v1859, %v1858
  %v1865 = vsel %vm259, %v1846, 0
  %v1868 = vsel %vm259, %v1847, 0
  %1870 = vmatprep.subr.bf16.mxu0 0
  %1871 = vmatpush1.bf16.msra.mxu0 0
  %1872 = vmatprep.subr.bf16.mxu0 0
  %1873 = vmatpush1.bf16.msra.mxu0 0
  %1874 = vmatprep.subr.bf16.mxu0 0
  %1875 = vmatpush1.bf16.msra.mxu0 0
  %1876 = vmatprep.subr.bf16.mxu0 0
  %1877 = vmatpush1.bf16.msra.mxu0 0
  %1878 = vmatprep.subr.bf16.mxu0 0
  %1879 = vmatpush1.bf16.msra.mxu0 0
  %1880 = vmatprep.subr.bf16.mxu0 0
  %1881 = vmatpush1.bf16.msra.mxu0 0
  %1882 = vmatprep.subr.bf16.mxu0 0
  %1883 = vmatpush1.bf16.msra.mxu0 %v1861
  %1884 = vmatprep.subr.bf16.mxu0 0
  %1885 = vmatpush1.bf16.msra.mxu0 %v1860
  %1886 = vmatprep.subr.bf16.mxu0 0
  %1887 = vmatpush2.bf16.msra.mxu0 0
  %1888 = vmatprep.subr.bf16.mxu0 0
  %1889 = vmatpush2.bf16.msra.mxu0 0
  %1890 = vmatprep.subr.bf16.mxu0 0
  %1891 = vmatpush2.bf16.msra.mxu0 0
  %1892 = vmatprep.subr.bf16.mxu0 0
  %1893 = vmatpush2.bf16.msra.mxu0 0
  %1894 = vmatprep.subr.bf16.mxu0 0
  %1895 = vmatpush2.bf16.msra.mxu0 0
  %1896 = vmatprep.subr.bf16.mxu0 0
  %1897 = vmatpush2.bf16.msra.mxu0 0
  %1898 = vmatprep.subr.bf16.mxu0 0
  %1899 = vmatpush2.bf16.msra.mxu0 0
  %1900 = vmatprep.subr.bf16.mxu0 0
  %1901 = vmatpush2.bf16.msra.mxu0 0
  %1902 = vmatprep.mubr.bf16.mxu0 0
  %1903 = vmatmul.mubr.bf16.gmra.mxu0 %v1865
  %v1904 = vpop.f32.mrf.mxu0
  %v1905 = vadd.f32 0.0, %v1904
  %v1906 = vpop.f32.mrf.mxu0
  %v1907 = vpop.f32.mrf.mxu0
  %v1908 = vadd.f32 0.0, %v1907
  %v1909 = vpop.f32.mrf.mxu0
  %1910 = vmatprep.mubr.bf16.mxu0 0
  %1911 = vmatmul.mubr.bf16.gmra.mxu0 %v1868
  %v1912 = vpop.f32.mrf.mxu0
  %v1913 = vadd.f32 0.0, %v1912
  %v1914 = vpop.f32.mrf.mxu0
  %v1915 = vpop.f32.mrf.mxu0
  %v1916 = vadd.f32 0.0, %v1915
  %v1917 = vpop.f32.mrf.mxu0
  %1918 = vdwg.mxu0
  %v1919 = vadd.f32 %v1842, %v1905
  %v1920 = vadd.f32 %v1843, %v1908
  %v1921 = vadd.f32 %v1844, %v1913
  %v1922 = vadd.f32 %v1845, %v1916
  %v1923 = vpack.c.bf16 %v1760, %v1752
  %v1924 = vpack.c.bf16 %v1761, %v1755
  %v1925 = vld [vmem:[%s57 + $0x20] sm:$0xf]
  %v1926 = vld [vmem:[%s57 + $0x24] sm:$0xf]
  %v1927 = vld [vmem:[%s57 + $0x28] sm:$0xf]
  %v1928 = vld [vmem:[%s57 + $0x2c] sm:$0xf]
  %v1933 = vunpack.c.l.b16 %v1925
  %v1934 = vunpack.c.l.b16 %v1926
  %v1935 = vunpack.c.l.b16 %v1927
  %v1936 = vunpack.c.l.b16 %v1928
  %v1937 = vpack.c.b16 %v1934, %v1933
  %v1938 = vpack.c.b16 %v1936, %v1935
  %v1942 = vsel %vm259, %v1923, 0
  %v1945 = vsel %vm259, %v1924, 0
  %1947 = vmatprep.subr.bf16.mxu0 0
  %1948 = vmatpush1.bf16.msra.mxu0 0
  %1949 = vmatprep.subr.bf16.mxu0 0
  %1950 = vmatpush1.bf16.msra.mxu0 0
  %1951 = vmatprep.subr.bf16.mxu0 0
  %1952 = vmatpush1.bf16.msra.mxu0 0
  %1953 = vmatprep.subr.bf16.mxu0 0
  %1954 = vmatpush1.bf16.msra.mxu0 0
  %1955 = vmatprep.subr.bf16.mxu0 0
  %1956 = vmatpush1.bf16.msra.mxu0 0
  %1957 = vmatprep.subr.bf16.mxu0 0
  %1958 = vmatpush1.bf16.msra.mxu0 0
  %1959 = vmatprep.subr.bf16.mxu0 0
  %1960 = vmatpush1.bf16.msra.mxu0 %v1938
  %1961 = vmatprep.subr.bf16.mxu0 0
  %1962 = vmatpush1.bf16.msra.mxu0 %v1937
  %1963 = vmatprep.subr.bf16.mxu0 0
  %1964 = vmatpush2.bf16.msra.mxu0 0
  %1965 = vmatprep.subr.bf16.mxu0 0
  %1966 = vmatpush2.bf16.msra.mxu0 0
  %1967 = vmatprep.subr.bf16.mxu0 0
  %1968 = vmatpush2.bf16.msra.mxu0 0
  %1969 = vmatprep.subr.bf16.mxu0 0
  %1970 = vmatpush2.bf16.msra.mxu0 0
  %1971 = vmatprep.subr.bf16.mxu0 0
  %1972 = vmatpush2.bf16.msra.mxu0 0
  %1973 = vmatprep.subr.bf16.mxu0 0
  %1974 = vmatpush2.bf16.msra.mxu0 0
  %1975 = vmatprep.subr.bf16.mxu0 0
  %1976 = vmatpush2.bf16.msra.mxu0 0
  %1977 = vmatprep.subr.bf16.mxu0 0
  %1978 = vmatpush2.bf16.msra.mxu0 0
  %1979 = vmatprep.mubr.bf16.mxu0 0
  %1980 = vmatmul.mubr.bf16.gmra.mxu0 %v1942
  %v1981 = vpop.f32.mrf.mxu0
  %v1982 = vadd.f32 0.0, %v1981
  %v1983 = vpop.f32.mrf.mxu0
  %v1984 = vpop.f32.mrf.mxu0
  %v1985 = vadd.f32 0.0, %v1984
  %v1986 = vpop.f32.mrf.mxu0
  %1987 = vmatprep.mubr.bf16.mxu0 0
  %1988 = vmatmul.mubr.bf16.gmra.mxu0 %v1945
  %v1989 = vpop.f32.mrf.mxu0
  %v1990 = vadd.f32 0.0, %v1989
  %v1991 = vpop.f32.mrf.mxu0
  %v1992 = vpop.f32.mrf.mxu0
  %v1993 = vadd.f32 0.0, %v1992
  %v1994 = vpop.f32.mrf.mxu0
  %1995 = vdwg.mxu0
  %v1996 = vadd.f32 %v1919, %v1982
  %v1997 = vadd.f32 %v1920, %v1985
  %v1998 = vadd.f32 %v1921, %v1990
  %v1999 = vadd.f32 %v1922, %v1993
  %v2000 = vtanh.pop %v1996
  %v2001 = vtanh.pop %v1997
  %v2002 = vtanh.pop %v1998
  %v2003 = vtanh.pop %v1999
  %v2008 = vrot.slane %v2000, 7
  %v2009 = vrot.slane %v2001, 7
  %v2010 = vsel %vm326, %v2008, %v2009
  %v2011 = vrot.slane %v2002, 7
  %v2012 = vrot.slane %v2003, 7
  %v2013 = vsel %vm326, %v2011, %v2012
  %v2018 = vsel %vm326, 0.0, %v2008
  %v2019 = vsel %vm326, 0.0, %v2011
  %v2020 = vrot.slane %v2000, 1
  %v2021 = vrot.slane %v2001, 1
  %v2022 = vsel %vm333, %v2020, %v2021
  %v2023 = vrot.slane %v2002, 1
  %v2024 = vrot.slane %v2003, 1
  %v2025 = vsel %vm333, %v2023, %v2024
  %v2030 = vsel %vm333, %v2021, 0.0
  %v2031 = vsel %vm333, %v2024, 0.0
  %v2032 = vld [vmem:[%s63] sm:$0x1]
  %v2033 = vpack.c.bf16 %v2010, %v2018
  %v2034 = vpack.c.bf16 %v2013, %v2019
  %v2035 = vld [vmem:[%s61] sm:$0xf]
  %v2036 = vld [vmem:[%s61 + $0x4] sm:$0xf]
  %v2037 = vld [vmem:[%s61 + $0x8] sm:$0xf]
  %v2038 = vld [vmem:[%s61 + $0xc] sm:$0xf]
  %v2043 = vunpack.c.l.b16 %v2035
  %v2044 = vunpack.c.l.b16 %v2036
  %v2045 = vunpack.c.l.b16 %v2037
  %v2046 = vunpack.c.l.b16 %v2038
  %v2047 = vpack.c.b16 %v2044, %v2043
  %v2048 = vpack.c.b16 %v2046, %v2045
  %v2052 = vsel %vm259, %v2033, 0
  %v2055 = vsel %vm259, %v2034, 0
  %2057 = vmatprep.subr.bf16.mxu0 0
  %2058 = vmatpush1.bf16.msra.mxu0 0
  %2059 = vmatprep.subr.bf16.mxu0 0
  %2060 = vmatpush1.bf16.msra.mxu0 0
  %2061 = vmatprep.subr.bf16.mxu0 0
  %2062 = vmatpush1.bf16.msra.mxu0 0
  %2063 = vmatprep.subr.bf16.mxu0 0
  %2064 = vmatpush1.bf16.msra.mxu0 0
  %2065 = vmatprep.subr.bf16.mxu0 0
  %2066 = vmatpush1.bf16.msra.mxu0 0
  %2067 = vmatprep.subr.bf16.mxu0 0
  %2068 = vmatpush1.bf16.msra.mxu0 0
  %2069 = vmatprep.subr.bf16.mxu0 0
  %2070 = vmatpush1.bf16.msra.mxu0 %v2048
  %2071 = vmatprep.subr.bf16.mxu0 0
  %2072 = vmatpush1.bf16.msra.mxu0 %v2047
  %2073 = vmatprep.subr.bf16.mxu0 0
  %2074 = vmatpush2.bf16.msra.mxu0 0
  %2075 = vmatprep.subr.bf16.mxu0 0
  %2076 = vmatpush2.bf16.msra.mxu0 0
  %2077 = vmatprep.subr.bf16.mxu0 0
  %2078 = vmatpush2.bf16.msra.mxu0 0
  %2079 = vmatprep.subr.bf16.mxu0 0
  %2080 = vmatpush2.bf16.msra.mxu0 0
  %2081 = vmatprep.subr.bf16.mxu0 0
  %2082 = vmatpush2.bf16.msra.mxu0 0
  %2083 = vmatprep.subr.bf16.mxu0 0
  %2084 = vmatpush2.bf16.msra.mxu0 0
  %2085 = vmatprep.subr.bf16.mxu0 0
  %2086 = vmatpush2.bf16.msra.mxu0 0
  %2087 = vmatprep.subr.bf16.mxu0 0
  %2088 = vmatpush2.bf16.msra.mxu0 0
  %2089 = vmatprep.mubr.bf16.mxu0 0
  %2090 = vmatmul.mubr.bf16.gmra.mxu0 %v2052
  %v2091 = vpop.f32.mrf.mxu0
  %v2092 = vadd.f32 0.0, %v2091
  %v2093 = vpop.f32.mrf.mxu0
  %v2094 = vpop.f32.mrf.mxu0
  %v2095 = vadd.f32 0.0, %v2094
  %v2096 = vpop.f32.mrf.mxu0
  %2097 = vmatprep.mubr.bf16.mxu0 0
  %2098 = vmatmul.mubr.bf16.gmra.mxu0 %v2055
  %v2099 = vpop.f32.mrf.mxu0
  %v2100 = vadd.f32 0.0, %v2099
  %v2101 = vpop.f32.mrf.mxu0
  %v2102 = vpop.f32.mrf.mxu0
  %v2103 = vadd.f32 0.0, %v2102
  %v2104 = vpop.f32.mrf.mxu0
  %2105 = vdwg.mxu0
  %v2107 = vlaneseq
  %v2108 = vshrl.u32 %v2107, 7
  %v2109 = vsub.s32 0, %v2108
  %v2110 = vrot.slane %v2032, %v2109
  %v2112 = vadd.f32 %v2110, %v2092
  %v2113 = vadd.f32 %v2110, %v2095
  %v2114 = vadd.f32 %v2110, %v2100
  %v2115 = vadd.f32 %v2110, %v2103
  %v2116 = vpack.c.bf16 %v2001, %v2000
  %v2117 = vpack.c.bf16 %v2003, %v2002
  %v2118 = vld [vmem:[%s61 + $0x10] sm:$0xf]
  %v2119 = vld [vmem:[%s61 + $0x14] sm:$0xf]
  %v2120 = vld [vmem:[%s61 + $0x18] sm:$0xf]
  %v2121 = vld [vmem:[%s61 + $0x1c] sm:$0xf]
  %v2126 = vunpack.c.l.b16 %v2118
  %v2127 = vunpack.c.l.b16 %v2119
  %v2128 = vunpack.c.l.b16 %v2120
  %v2129 = vunpack.c.l.b16 %v2121
  %v2130 = vpack.c.b16 %v2127, %v2126
  %v2131 = vpack.c.b16 %v2129, %v2128
  %v2135 = vsel %vm259, %v2116, 0
  %v2138 = vsel %vm259, %v2117, 0
  %2140 = vmatprep.subr.bf16.mxu0 0
  %2141 = vmatpush1.bf16.msra.mxu0 0
  %2142 = vmatprep.subr.bf16.mxu0 0
  %2143 = vmatpush1.bf16.msra.mxu0 0
  %2144 = vmatprep.subr.bf16.mxu0 0
  %2145 = vmatpush1.bf16.msra.mxu0 0
  %2146 = vmatprep.subr.bf16.mxu0 0
  %2147 = vmatpush1.bf16.msra.mxu0 0
  %2148 = vmatprep.subr.bf16.mxu0 0
  %2149 = vmatpush1.bf16.msra.mxu0 0
  %2150 = vmatprep.subr.bf16.mxu0 0
  %2151 = vmatpush1.bf16.msra.mxu0 0
  %2152 = vmatprep.subr.bf16.mxu0 0
  %2153 = vmatpush1.bf16.msra.mxu0 %v2131
  %2154 = vmatprep.subr.bf16.mxu0 0
  %2155 = vmatpush1.bf16.msra.mxu0 %v2130
  %2156 = vmatprep.subr.bf16.mxu0 0
  %2157 = vmatpush2.bf16.msra.mxu0 0
  %2158 = vmatprep.subr.bf16.mxu0 0
  %2159 = vmatpush2.bf16.msra.mxu0 0
  %2160 = vmatprep.subr.bf16.mxu0 0
  %2161 = vmatpush2.bf16.msra.mxu0 0
  %2162 = vmatprep.subr.bf16.mxu0 0
  %2163 = vmatpush2.bf16.msra.mxu0 0
  %2164 = vmatprep.subr.bf16.mxu0 0
  %2165 = vmatpush2.bf16.msra.mxu0 0
  %2166 = vmatprep.subr.bf16.mxu0 0
  %2167 = vmatpush2.bf16.msra.mxu0 0
  %2168 = vmatprep.subr.bf16.mxu0 0
  %2169 = vmatpush2.bf16.msra.mxu0 0
  %2170 = vmatprep.subr.bf16.mxu0 0
  %2171 = vmatpush2.bf16.msra.mxu0 0
  %2172 = vmatprep.mubr.bf16.mxu0 0
  %2173 = vmatmul.mubr.bf16.gmra.mxu0 %v2135
  %v2174 = vpop.f32.mrf.mxu0
  %v2175 = vadd.f32 0.0, %v2174
  %v2176 = vpop.f32.mrf.mxu0
  %v2177 = vpop.f32.mrf.mxu0
  %v2178 = vadd.f32 0.0, %v2177
  %v2179 = vpop.f32.mrf.mxu0
  %2180 = vmatprep.mubr.bf16.mxu0 0
  %2181 = vmatmul.mubr.bf16.gmra.mxu0 %v2138
  %v2182 = vpop.f32.mrf.mxu0
  %v2183 = vadd.f32 0.0, %v2182
  %v2184 = vpop.f32.mrf.mxu0
  %v2185 = vpop.f32.mrf.mxu0
  %v2186 = vadd.f32 0.0, %v2185
  %v2187 = vpop.f32.mrf.mxu0
  %2188 = vdwg.mxu0
  %v2189 = vadd.f32 %v2112, %v2175
  %v2190 = vadd.f32 %v2113, %v2178
  %v2191 = vadd.f32 %v2114, %v2183
  %v2192 = vadd.f32 %v2115, %v2186
  %v2193 = vpack.c.bf16 %v2030, %v2022
  %v2194 = vpack.c.bf16 %v2031, %v2025
  %v2195 = vld [vmem:[%s61 + $0x20] sm:$0xf]
  %v2196 = vld [vmem:[%s61 + $0x24] sm:$0xf]
  %v2197 = vld [vmem:[%s61 + $0x28] sm:$0xf]
  %v2198 = vld [vmem:[%s61 + $0x2c] sm:$0xf]
  %v2203 = vunpack.c.l.b16 %v2195
  %v2204 = vunpack.c.l.b16 %v2196
  %v2205 = vunpack.c.l.b16 %v2197
  %v2206 = vunpack.c.l.b16 %v2198
  %v2207 = vpack.c.b16 %v2204, %v2203
  %v2208 = vpack.c.b16 %v2206, %v2205
  %v2212 = vsel %vm259, %v2193, 0
  %v2215 = vsel %vm259, %v2194, 0
  %2217 = vmatprep.subr.bf16.mxu0 0
  %2218 = vmatpush1.bf16.msra.mxu0 0
  %2219 = vmatprep.subr.bf16.mxu0 0
  %2220 = vmatpush1.bf16.msra.mxu0 0
  %2221 = vmatprep.subr.bf16.mxu0 0
  %2222 = vmatpush1.bf16.msra.mxu0 0
  %2223 = vmatprep.subr.bf16.mxu0 0
  %2224 = vmatpush1.bf16.msra.mxu0 0
  %2225 = vmatprep.subr.bf16.mxu0 0
  %2226 = vmatpush1.bf16.msra.mxu0 0
  %2227 = vmatprep.subr.bf16.mxu0 0
  %2228 = vmatpush1.bf16.msra.mxu0 0
  %2229 = vmatprep.subr.bf16.mxu0 0
  %2230 = vmatpush1.bf16.msra.mxu0 %v2208
  %2231 = vmatprep.subr.bf16.mxu0 0
  %2232 = vmatpush1.bf16.msra.mxu0 %v2207
  %2233 = vmatprep.subr.bf16.mxu0 0
  %2234 = vmatpush2.bf16.msra.mxu0 0
  %2235 = vmatprep.subr.bf16.mxu0 0
  %2236 = vmatpush2.bf16.msra.mxu0 0
  %2237 = vmatprep.subr.bf16.mxu0 0
  %2238 = vmatpush2.bf16.msra.mxu0 0
  %2239 = vmatprep.subr.bf16.mxu0 0
  %2240 = vmatpush2.bf16.msra.mxu0 0
  %2241 = vmatprep.subr.bf16.mxu0 0
  %2242 = vmatpush2.bf16.msra.mxu0 0
  %2243 = vmatprep.subr.bf16.mxu0 0
  %2244 = vmatpush2.bf16.msra.mxu0 0
  %2245 = vmatprep.subr.bf16.mxu0 0
  %2246 = vmatpush2.bf16.msra.mxu0 0
  %2247 = vmatprep.subr.bf16.mxu0 0
  %2248 = vmatpush2.bf16.msra.mxu0 0
  %2249 = vmatprep.mubr.bf16.mxu0 0
  %2250 = vmatmul.mubr.bf16.gmra.mxu0 %v2212
  %v2251 = vpop.f32.mrf.mxu0
  %v2252 = vadd.f32 0.0, %v2251
  %v2253 = vpop.f32.mrf.mxu0
  %v2254 = vpop.f32.mrf.mxu0
  %v2255 = vadd.f32 0.0, %v2254
  %v2256 = vpop.f32.mrf.mxu0
  %2257 = vmatprep.mubr.bf16.mxu0 0
  %2258 = vmatmul.mubr.bf16.gmra.mxu0 %v2215
  %v2259 = vpop.f32.mrf.mxu0
  %v2260 = vadd.f32 0.0, %v2259
  %v2261 = vpop.f32.mrf.mxu0
  %v2262 = vpop.f32.mrf.mxu0
  %v2263 = vadd.f32 0.0, %v2262
  %v2264 = vpop.f32.mrf.mxu0
  %2265 = vdwg.mxu0
  %v2266 = vadd.f32 %v2189, %v2252
  %v2267 = vadd.f32 %v2190, %v2255
  %v2268 = vadd.f32 %v2191, %v2260
  %v2269 = vadd.f32 %v2192, %v2263
  %v2270 = vmul.f32 %v2266, %v1391
  %v2271 = vmul.f32 %v2267, %v1396
  %v2272 = vmul.f32 %v2268, %v1401
  %v2273 = vmul.f32 %v2269, %v1406
  %2274 = vst.msk [vmem:[%s65] sm:$0xff] %vm346, %v2270
  %2275 = vst.msk [vmem:[%s65 + $0x8] sm:$0xff] %vm346, %v2271
  %2276 = vst.msk [vmem:[%s65 + $0x10] sm:$0xff] %vm346, %v2272
  %2277 = vst.msk [vmem:[%s65 + $0x18] sm:$0xff] %vm346, %v2273
  %2282 = vrot.lane.b32.xlu0 %v1545, 16
  %v2283 = vpop.permute.xlu0 %2282
  %2284 = vrot.lane.b32.xlu0 %v1546, 16
  %v2285 = vpop.permute.xlu0 %2284
  %2286 = vrot.lane.b32.xlu0 %v1547, 16
  %v2287 = vpop.permute.xlu0 %2286
  %2288 = vrot.lane.b32.xlu0 %v1548, 16
  %v2289 = vpop.permute.xlu0 %2288
  %vm2294 = vcmask 261248
  %2295 = vst.msk [vmem:[%s65] sm:$0xff] %vm2294, %v2283
  %2296 = vst.msk [vmem:[%s65 + $0x8] sm:$0xff] %vm2294, %v2285
  %2297 = vst.msk [vmem:[%s65 + $0x10] sm:$0xff] %vm2294, %v2287
  %2298 = vst.msk [vmem:[%s65 + $0x18] sm:$0xff] %vm2294, %v2289
  %2299 = vrot.lane.b32.xlu0 %v1476, 32
  %v2300 = vpop.permute.xlu0 %2299
  %2301 = vrot.lane.b32.xlu0 %v1479, 32
  %v2302 = vpop.permute.xlu0 %2301
  %2303 = vrot.lane.b32.xlu0 %v1523, 32
  %v2304 = vpop.permute.xlu0 %2303
  %2305 = vrot.lane.b32.xlu0 %v1526, 32
  %v2306 = vpop.permute.xlu0 %2305
  %vm2311 = vcmask 392448
  %2312 = vst.msk [vmem:[%s65] sm:$0xff] %vm2311, %v2300
  %2313 = vst.msk [vmem:[%s65 + $0x8] sm:$0xff] %vm2311, %v2302
  %2314 = vst.msk [vmem:[%s65 + $0x10] sm:$0xff] %vm2311, %v2304
  %2315 = vst.msk [vmem:[%s65 + $0x18] sm:$0xff] %vm2311, %v2306
  %2320 = vrot.lane.b32.xlu0 %v1279, 48
  %v2321 = vpop.permute.xlu0 %2320
  %2322 = vrot.lane.b32.xlu0 %v1280, 48
  %v2323 = vpop.permute.xlu0 %2322
  %2324 = vrot.lane.b32.xlu0 %v1281, 48
  %v2325 = vpop.permute.xlu0 %2324
  %2326 = vrot.lane.b32.xlu0 %v1282, 48
  %v2327 = vpop.permute.xlu0 %2326
  %vm2332 = vcmask 458112
  %2333 = vst.msk [vmem:[%s65] sm:$0xff] %vm2332, %v2321
  %2334 = vst.msk [vmem:[%s65 + $0x8] sm:$0xff] %vm2332, %v2323
  %2335 = vst.msk [vmem:[%s65 + $0x10] sm:$0xff] %vm2332, %v2325
  %2336 = vst.msk [vmem:[%s65 + $0x18] sm:$0xff] %vm2332, %v2327
  %2341 = vrot.lane.b32.xlu0 %v1295, 56
  %v2342 = vpop.permute.xlu0 %2341
  %2343 = vrot.lane.b32.xlu0 %v1296, 56
  %v2344 = vpop.permute.xlu0 %2343
  %2345 = vrot.lane.b32.xlu0 %v1297, 56
  %v2346 = vpop.permute.xlu0 %2345
  %2347 = vrot.lane.b32.xlu0 %v1298, 56
  %v2348 = vpop.permute.xlu0 %2347
  %vm2353 = vcmask 523712
  %2354 = vst.msk [vmem:[%s65] sm:$0xff] %vm2353, %v2342
  %2355 = vst.msk [vmem:[%s65 + $0x8] sm:$0xff] %vm2353, %v2344
  %2356 = vst.msk [vmem:[%s65 + $0x10] sm:$0xff] %vm2353, %v2346
  %2357 = vst.msk [vmem:[%s65 + $0x18] sm:$0xff] %vm2353, %v2348
  %2362 = vrot.lane.b32.xlu0 %v1408, 64
  %v2363 = vpop.permute.xlu0 %2362
  %2364 = vrot.lane.b32.xlu0 %v1409, 64
  %v2365 = vpop.permute.xlu0 %2364
  %2366 = vrot.lane.b32.xlu0 %v1410, 64
  %v2367 = vpop.permute.xlu0 %2366
  %2368 = vrot.lane.b32.xlu0 %v1411, 64
  %v2369 = vpop.permute.xlu0 %2368
  %vm2374 = vcmask 589312
  %2375 = vst.msk [vmem:[%s65] sm:$0xff] %vm2374, %v2363
  %2376 = vst.msk [vmem:[%s65 + $0x8] sm:$0xff] %vm2374, %v2365
  %2377 = vst.msk [vmem:[%s65 + $0x10] sm:$0xff] %vm2374, %v2367
  %2378 = vst.msk [vmem:[%s65 + $0x18] sm:$0xff] %vm2374, %v2369
  %vm2379 = vcmask 1048128
  %2380 = vst.msk [vmem:[%s65] sm:$0xff] %vm2379, 0.0
  %2381 = vst.msk [vmem:[%s65 + $0x8] sm:$0xff] %vm2379, 0.0
  %2382 = vst.msk [vmem:[%s65 + $0x10] sm:$0xff] %vm2379, 0.0
  %2383 = vst.msk [vmem:[%s65 + $0x18] sm:$0xff] %vm2379, 0.0
  %2386 = vset.pattern.permute.xlu0 0
  %2387 = vperm.xlu0 %2386, %v730
  %v2388 = vpop.permute.xlu0 %2387
  %2389 = vset.pattern.permute.xlu0 0
  %2390 = vperm.xlu0 %2389, %v731
  %v2391 = vpop.permute.xlu0 %2390
  %v2392 = vlaneseq
  %v2393 = vshrl.u32 %v2392, 7
  %v2394 = vsub.s32 %v1172, %v2393
  %v2395 = vrot.slane %v2388, %v2394
  %v2396 = vlaneseq
  %v2397 = vshrl.u32 %v2396, 7
  %v2398 = vsub.s32 %v1172, %v2397
  %v2399 = vrot.slane %v2391, %v2398
  %v2400 = vsel %vm1181, %v2399, %v2395
  %vm2402 = vcmask 58368
  %2403 = vst.msk [vmem:[%s67] sm:$0x3] %vm2402, %v2400
  %v2406 = vsel %vm1181, %v1429, %v1420
  %2407 = vrot.lane.b32.xlu0 %v2406, 8
  %v2408 = vpop.permute.xlu0 %2407
  %vm2410 = vcmask 123968
  %2411 = vst.msk [vmem:[%s67] sm:$0x3] %vm2410, %v2408
  %vm2412 = vcmask 1041536
  %2413 = vst.msk [vmem:[%s67] sm:$0x3] %vm2412, 0.0
  // Predicated region
  $region130: #{matcha_forward.1} parent=0 // pred_check
    _
  $region131: #{matcha_forward.1} parent=0 // pred_check_branch
    %2415 = sbr.rel (0) target = $region133
  $region132: #{matcha_forward.1} parent=0 // pred_region
    _
  $region133: #{matcha_forward.1} parent=0 // pred_fallthru
    _
  // Predicated region
  $region134: #{matcha_forward.1} parent=0 // pred_check
    _
  $region135: #{matcha_forward.1} parent=0 // pred_check_branch
    %2417 = sbr.rel (0) target = $region137
  $region136: #{matcha_forward.1} parent=0 // pred_region
    _
  $region137: #{matcha_forward.1} parent=0 // pred_fallthru
    _
  // Predicated region
  $region138: #{matcha_forward.1} parent=0 // pred_check
    _
  $region139: #{matcha_forward.1} parent=0 // pred_check_branch
    %2419 = sbr.rel (0) target = $region141
  $region140: #{matcha_forward.1} parent=0 // pred_region
    _
  $region141: #{matcha_forward.1} parent=0 // pred_fallthru
    _
  // Predicated region
  $region142: #{matcha_forward.1} parent=0 // pred_check
    _
  $region143: #{matcha_forward.1} parent=0 // pred_check_branch
    %2421 = sbr.rel (0) target = $region145
  $region144: #{matcha_forward.1} parent=0 // pred_region
    _
  $region145: #{matcha_forward.1} parent=0 // pred_fallthru
    _

</llo_original>
